<compile_context>
chip_gen: v5e
topology: v5e:2x2
jax: 0.10.0
libtpu: 0.0.40
codegen_flags: <defaults>
</compile_context>

<pallas_src>
import functools

import jax
import jax.numpy as jnp
from jax.experimental import pallas as pl
from jax.experimental.pallas import tpu as pltpu


# ----------------------------- Pallas kernels --------------------------------
def _pool_kernel(x_ref, avg_ref, max_ref, sum_sc, max_sc, *, inv_hw):
    """Fused global avg + max pool over the spatial axis.

    Block shapes:
      x_ref   : [N, TILE_C, TILE_HW]   one spatial tile of one channel tile
      avg_ref : [N, TILE_C]            written once, at the last spatial step
      max_ref : [N, TILE_C]
      sum_sc / max_sc : f32 VMEM accumulators, persistent across grid steps.
    """
    li = pl.program_id(1)                       # spatial (reduction) step

    @pl.when(li == 0)
    def _init():
        sum_sc[...] = jnp.zeros_like(sum_sc)
        max_sc[...] = jnp.full_like(max_sc, -jnp.inf)

    xt = x_ref[...].astype(jnp.float32)         # [N, TILE_C, TILE_HW]
    sum_sc[...] = sum_sc[...] + jnp.sum(xt, axis=-1)
    max_sc[...] = jnp.maximum(max_sc[...], jnp.max(xt, axis=-1))

    @pl.when(li == pl.num_programs(1) - 1)
    def _finalize():
        avg_ref[...] = (sum_sc[...] * inv_hw).astype(avg_ref.dtype)
        max_ref[...] = max_sc[...].astype(max_ref.dtype)


def _mlp_kernel(avg_ref, max_ref, w1_ref, w2_ref, o_ref):
    """sigmoid( relu(avg@W1)@W2 + relu(max@W1)@W2 ) fully fused, one store."""
    w1 = w1_ref[...]
    w2 = w2_ref[...]
    a = jnp.maximum(
        jnp.dot(avg_ref[...], w1, preferred_element_type=jnp.float32), 0.0)
    m = jnp.maximum(
        jnp.dot(max_ref[...], w1, preferred_element_type=jnp.float32), 0.0)
    y = (jnp.dot(a, w2, preferred_element_type=jnp.float32)
         + jnp.dot(m, w2, preferred_element_type=jnp.float32))
    o_ref[...] = jax.nn.sigmoid(y).astype(o_ref.dtype)


# ----------------------------- tiling helpers ---------------------------------
def _pick_tile(total, cap, quantum):
    """Largest t <= cap with total % t == 0 and t % quantum == 0, else `total`.

    (Block dims must be multiples of the (8, 128) vreg tile OR the full dim.)
    """
    for t in range(min(cap, total), 0, -1):
        if total % t == 0 and t % quantum == 0:
            return t
    return total


# ----------------------------- forward wrapper --------------------------------
def channel_attention(x_nchw, w1, w2, *, tile_hw_cap=512, tile_c_cap=128):
    """ChannelAttention forward. w1: [C, C//ratio], w2: [C//ratio, C]."""
    n, c, h, w = x_nchw.shape
    hw = h * w
    ch = w1.shape[1]
    assert w1.shape == (c, ch) and w2.shape == (ch, c)

    # NCHW is already channel-major -> free [N, C, HW] view, no HBM transpose.
    x = x_nchw.reshape(n, c, hw)

    tile_c = _pick_tile(c, tile_c_cap, 128)      # lane dim of pooled outputs
    tile_hw = _pick_tile(hw, tile_hw_cap, 128)   # lane dim of the x blocks

    avg, mx = pl.pallas_call(
        functools.partial(_pool_kernel, inv_hw=1.0 / hw),
        out_shape=(jax.ShapeDtypeStruct((n, c), jnp.float32),
                   jax.ShapeDtypeStruct((n, c), jnp.float32)),
        grid=(c // tile_c, hw // tile_hw),
        in_specs=[pl.BlockSpec((n, tile_c, tile_hw),
                               lambda ci, li: (0, ci, li))],
        out_specs=(pl.BlockSpec((n, tile_c), lambda ci, li: (0, ci)),
                   pl.BlockSpec((n, tile_c), lambda ci, li: (0, ci))),
        scratch_shapes=[pltpu.VMEM((n, tile_c), jnp.float32),
                        pltpu.VMEM((n, tile_c), jnp.float32)],
        compiler_params=pltpu.CompilerParams(
            dimension_semantics=("parallel", "arbitrary")),
    )(x)

    att = pl.pallas_call(
        _mlp_kernel,
        out_shape=jax.ShapeDtypeStruct((n, c), jnp.float32),
        grid=(1,),
        in_specs=[pl.BlockSpec((n, c), lambda i: (0, 0)),
                  pl.BlockSpec((n, c), lambda i: (0, 0)),
                  pl.BlockSpec((c, ch), lambda i: (0, 0)),
                  pl.BlockSpec((ch, c), lambda i: (0, 0))],
        out_specs=pl.BlockSpec((n, c), lambda i: (0, 0)),
    )(avg, mx, w1, w2)

    return att.reshape(n, c, 1, 1)               # match PyTorch [N, C, 1, 1]


# ----------------------------- plain-JAX reference ----------------------------
def _reference(x_nchw, w1, w2):
    avg = jnp.mean(x_nchw, axis=(2, 3))
    mx = jnp.max(x_nchw, axis=(2, 3))
    mlp = lambda v: jnp.maximum(v @ w1, 0.0) @ w2
    y = jax.nn.sigmoid(mlp(avg) + mlp(mx))
    return y.reshape(x_nchw.shape[0], x_nchw.shape[1], 1, 1)


# ----------------------------- main -------------------------------------------
if __name__ == "__main__":
    key = jax.random.PRNGKey(0)
    kx, k1, k2 = jax.random.split(key, 3)

    N, C, H, W = 2, 256, 32, 32        # in_planes=256, ratio=16 -> hidden 16
    RATIO = 16
    CH = C // RATIO

    x = jax.random.normal(kx, (N, C, H, W), jnp.float32)
    # PyTorch Conv2d(C, C//r, 1, bias=False).weight is [C//r, C, 1, 1]; our
    # matmul layout is its [C, C//r] transpose (and [C//r, C] for the 2nd conv).
    w1 = 0.1 * jax.random.normal(k1, (C, CH), jnp.float32)
    w2 = 0.1 * jax.random.normal(k2, (CH, C), jnp.float32)

    out = jax.jit(channel_attention)(x, w1, w2)
    out = jax.block_until_ready(out)

    assert out.shape == (N, C, 1, 1), out.shape
    assert bool(jnp.all(jnp.isfinite(out)))
    ref = _reference(x, w1, w2)
    assert bool(jnp.allclose(out, ref, atol=2e-2, rtol=2e-2)), (
        float(jnp.max(jnp.abs(out - ref))))
    print("KERNEL_OK")
</pallas_src>

<mosaic_0001>
module attributes {stable_mosaic.version = 11 : i64} {
  func.func @_mlp_kernel(%arg0: i32, %arg1: memref<2x256xf32, #tpu.memory_space<vmem>>, %arg2: memref<2x256xf32, #tpu.memory_space<vmem>>, %arg3: memref<256x16xf32, #tpu.memory_space<vmem>>, %arg4: memref<16x256xf32, #tpu.memory_space<vmem>>, %arg5: memref<2x256xf32, #tpu.memory_space<vmem>>) attributes {dimension_semantics = [#tpu.dimension_semantics<arbitrary>], iteration_bounds = array<i64: 1>, scalar_prefetch = 0 : i64, scratch_operands = 0 : i64, tpu.core_type = #tpu.core_type<tc>, window_params = [{pipeline_mode = #tpu.pipeline_mode<synchronous>, transform_indices = @transform_0, window_bounds = array<i64: 2, 256>}, {pipeline_mode = #tpu.pipeline_mode<synchronous>, transform_indices = @transform_1, window_bounds = array<i64: 2, 256>}, {pipeline_mode = #tpu.pipeline_mode<synchronous>, transform_indices = @transform_2, window_bounds = array<i64: 256, 16>}, {pipeline_mode = #tpu.pipeline_mode<synchronous>, transform_indices = @transform_3, window_bounds = array<i64: 16, 256>}, {pipeline_mode = #tpu.pipeline_mode<synchronous>, transform_indices = @transform_4, window_bounds = array<i64: 2, 256>}]} {
    %c0 = arith.constant 0 : index
    %c0_0 = arith.constant 0 : index
    %0 = vector.load %arg3[%c0, %c0_0] : memref<256x16xf32, #tpu.memory_space<vmem>>, vector<256x16xf32>
    %c0_1 = arith.constant 0 : index
    %c0_2 = arith.constant 0 : index
    %1 = vector.load %arg4[%c0_1, %c0_2] : memref<16x256xf32, #tpu.memory_space<vmem>>, vector<16x256xf32>
    %c0_3 = arith.constant 0 : index
    %c0_4 = arith.constant 0 : index
    %2 = vector.load %arg1[%c0_3, %c0_4] : memref<2x256xf32, #tpu.memory_space<vmem>>, vector<2x256xf32>
    %cst = arith.constant dense<0.000000e+00> : vector<2x16xf32>
    %3 = tpu.matmul %2, %0, %cst {dimension_numbers = #tpu.dot_dimension_numbers<[1], [0], [0], [1], [0, 0, 1, 1], [], []>} : vector<2x256xf32>, vector<256x16xf32>, vector<2x16xf32> -> vector<2x16xf32>
    %cst_5 = arith.constant 0.000000e+00 : f32
    %4 = vector.broadcast %cst_5 : f32 to vector<2x16xf32>
    %5 = arith.maximumf %3, %4 : vector<2x16xf32>
    %c0_6 = arith.constant 0 : index
    %c0_7 = arith.constant 0 : index
    %6 = vector.load %arg2[%c0_6, %c0_7] : memref<2x256xf32, #tpu.memory_space<vmem>>, vector<2x256xf32>
    %cst_8 = arith.constant dense<0.000000e+00> : vector<2x16xf32>
    %7 = tpu.matmul %6, %0, %cst_8 {dimension_numbers = #tpu.dot_dimension_numbers<[1], [0], [0], [1], [0, 0, 1, 1], [], []>} : vector<2x256xf32>, vector<256x16xf32>, vector<2x16xf32> -> vector<2x16xf32>
    %cst_9 = arith.constant 0.000000e+00 : f32
    %8 = vector.broadcast %cst_9 : f32 to vector<2x16xf32>
    %9 = arith.maximumf %7, %8 : vector<2x16xf32>
    %cst_10 = arith.constant dense<0.000000e+00> : vector<2x256xf32>
    %10 = tpu.matmul %5, %1, %cst_10 {dimension_numbers = #tpu.dot_dimension_numbers<[1], [0], [0], [1], [0, 0, 1, 1], [], []>} : vector<2x16xf32>, vector<16x256xf32>, vector<2x256xf32> -> vector<2x256xf32>
    %cst_11 = arith.constant dense<0.000000e+00> : vector<2x256xf32>
    %11 = tpu.matmul %9, %1, %cst_11 {dimension_numbers = #tpu.dot_dimension_numbers<[1], [0], [0], [1], [0, 0, 1, 1], [], []>} : vector<2x16xf32>, vector<16x256xf32>, vector<2x256xf32> -> vector<2x256xf32>
    %12 = arith.addf %10, %11 : vector<2x256xf32>
    %13 = arith.negf %12 : vector<2x256xf32>
    %14 = math.exp %13 : vector<2x256xf32>
    %cst_12 = arith.constant 1.000000e+00 : f32
    %15 = vector.broadcast %cst_12 : f32 to vector<2x256xf32>
    %16 = arith.addf %15, %14 : vector<2x256xf32>
    %17 = arith.divf %15, %16 : vector<2x256xf32>
    %c0_13 = arith.constant 0 : index
    %c0_14 = arith.constant 0 : index
    %18 = vector.load %arg5[%c0_13, %c0_14] : memref<2x256xf32, #tpu.memory_space<vmem>>, vector<2x256xf32>
    tpu.vector_store %arg5[%c0_13, %c0_14], %17 {strides = array<i32>} : memref<2x256xf32, #tpu.memory_space<vmem>>, vector<2x256xf32>,
    return
  }
  func.func @transform_0(%arg0: i32) -> (i32, i32) {
    %c0_i32 = arith.constant 0 : i32
    %c0_i32_0 = arith.constant 0 : i32
    %c0_i32_1 = arith.constant 0 : i32
    return %c0_i32, %c0_i32_0 : i32, i32
  }
  func.func @transform_1(%arg0: i32) -> (i32, i32) {
    %c0_i32 = arith.constant 0 : i32
    %c0_i32_0 = arith.constant 0 : i32
    %c0_i32_1 = arith.constant 0 : i32
    return %c0_i32, %c0_i32_0 : i32, i32
  }
  func.func @transform_2(%arg0: i32) -> (i32, i32) {
    %c0_i32 = arith.constant 0 : i32
    %c0_i32_0 = arith.constant 0 : i32
    %c0_i32_1 = arith.constant 0 : i32
    return %c0_i32, %c0_i32_0 : i32, i32
  }
  func.func @transform_3(%arg0: i32) -> (i32, i32) {
    %c0_i32 = arith.constant 0 : i32
    %c0_i32_0 = arith.constant 0 : i32
    %c0_i32_1 = arith.constant 0 : i32
    return %c0_i32, %c0_i32_0 : i32, i32
  }
  func.func @transform_4(%arg0: i32) -> (i32, i32) {
    %c0_i32 = arith.constant 0 : i32
    %c0_i32_0 = arith.constant 0 : i32
    %c0_i32_1 = arith.constant 0 : i32
    return %c0_i32, %c0_i32_0 : i32, i32
  }
}

module attributes {stable_mosaic.version = 11 : i64} {
  func.func @_pool_kernel(%arg0: i32, %arg1: i32, %arg2: memref<2x128x512xf32, #tpu.memory_space<vmem>>, %arg3: memref<2x128xf32, #tpu.memory_space<vmem>>, %arg4: memref<2x128xf32, #tpu.memory_space<vmem>>, %arg5: memref<2x128xf32, #tpu.memory_space<vmem>>, %arg6: memref<2x128xf32, #tpu.memory_space<vmem>>) attributes {dimension_semantics = [#tpu.dimension_semantics<parallel>, #tpu.dimension_semantics<arbitrary>], iteration_bounds = array<i64: 2, 2>, scalar_prefetch = 0 : i64, scratch_operands = 2 : i64, tpu.core_type = #tpu.core_type<tc>, window_params = [{transform_indices = @transform_0, window_bounds = array<i64: 2, 128, 512>}, {transform_indices = @transform_1, window_bounds = array<i64: 2, 128>}, {transform_indices = @transform_2, window_bounds = array<i64: 2, 128>}]} {
    %c0_i32 = arith.constant 0 : i32
    %0 = arith.cmpi eq, %arg1, %c0_i32 : i32
    %1 = arith.extui %0 : i1 to i32
    %c0_i32_0 = arith.constant 0 : i32
    %2 = arith.cmpi ne, %1, %c0_i32_0 : i32
    scf.if %2 {
      %cst_13 = arith.constant 0.000000e+00 : f32
      %15 = vector.broadcast %cst_13 : f32 to vector<2x128xf32>
      %c0_14 = arith.constant 0 : index
      %c0_15 = arith.constant 0 : index
      %16 = vector.load %arg5[%c0_14, %c0_15] : memref<2x128xf32, #tpu.memory_space<vmem>>, vector<2x128xf32>
      tpu.vector_store %arg5[%c0_14, %c0_15], %15 {strides = array<i32>} : memref<2x128xf32, #tpu.memory_space<vmem>>, vector<2x128xf32>,
      %cst_16 = arith.constant 0xFF800000 : f32
      %17 = vector.broadcast %cst_16 : f32 to vector<2x128xf32>
      %c0_17 = arith.constant 0 : index
      %c0_18 = arith.constant 0 : index
      %18 = vector.load %arg6[%c0_17, %c0_18] : memref<2x128xf32, #tpu.memory_space<vmem>>, vector<2x128xf32>
      tpu.vector_store %arg6[%c0_17, %c0_18], %17 {strides = array<i32>} : memref<2x128xf32, #tpu.memory_space<vmem>>, vector<2x128xf32>,
    } else {
    }
    %c0 = arith.constant 0 : index
    %c0_1 = arith.constant 0 : index
    %c0_2 = arith.constant 0 : index
    %3 = vector.load %arg2[%c0, %c0_1, %c0_2] : memref<2x128x512xf32, #tpu.memory_space<vmem>>, vector<2x128x512xf32>
    %c0_3 = arith.constant 0 : index
    %c0_4 = arith.constant 0 : index
    %4 = vector.load %arg5[%c0_3, %c0_4] : memref<2x128xf32, #tpu.memory_space<vmem>>, vector<2x128xf32>
    %cst = arith.constant dense<0.000000e+00> : vector<2x128xf32>
    %5 = vector.multi_reduction <add>, %3, %cst [2] : vector<2x128x512xf32> to vector<2x128xf32>
    %6 = arith.addf %4, %5 : vector<2x128xf32>
    %c0_5 = arith.constant 0 : index
    %c0_6 = arith.constant 0 : index
    %7 = vector.load %arg5[%c0_5, %c0_6] : memref<2x128xf32, #tpu.memory_space<vmem>>, vector<2x128xf32>
    tpu.vector_store %arg5[%c0_5, %c0_6], %6 {strides = array<i32>} : memref<2x128xf32, #tpu.memory_space<vmem>>, vector<2x128xf32>,
    %c0_7 = arith.constant 0 : index
    %c0_8 = arith.constant 0 : index
    %8 = vector.load %arg6[%c0_7, %c0_8] : memref<2x128xf32, #tpu.memory_space<vmem>>, vector<2x128xf32>
    %cst_9 = arith.constant dense<0xFF800000> : vector<2x128xf32>
    %9 = vector.multi_reduction <maximumf>, %3, %cst_9 [2] : vector<2x128x512xf32> to vector<2x128xf32>
    %10 = arith.maximumf %8, %9 : vector<2x128xf32>
    %c0_10 = arith.constant 0 : index
    %c0_11 = arith.constant 0 : index
    %11 = vector.load %arg6[%c0_10, %c0_11] : memref<2x128xf32, #tpu.memory_space<vmem>>, vector<2x128xf32>
    tpu.vector_store %arg6[%c0_10, %c0_11], %10 {strides = array<i32>} : memref<2x128xf32, #tpu.memory_space<vmem>>, vector<2x128xf32>,
    %c1_i32 = arith.constant 1 : i32
    %12 = arith.cmpi eq, %arg1, %c1_i32 : i32
    %13 = arith.extui %12 : i1 to i32
    %c0_i32_12 = arith.constant 0 : i32
    %14 = arith.cmpi ne, %13, %c0_i32_12 : i32
    scf.if %14 {
      %c0_13 = arith.constant 0 : index
      %c0_14 = arith.constant 0 : index
      %15 = vector.load %arg5[%c0_13, %c0_14] : memref<2x128xf32, #tpu.memory_space<vmem>>, vector<2x128xf32>
      %cst_15 = arith.constant 9.765625E-4 : f32
      %16 = vector.broadcast %cst_15 : f32 to vector<2x128xf32>
      %17 = arith.mulf %15, %16 : vector<2x128xf32>
      %c0_16 = arith.constant 0 : index
      %c0_17 = arith.constant 0 : index
      %18 = vector.load %arg3[%c0_16, %c0_17] : memref<2x128xf32, #tpu.memory_space<vmem>>, vector<2x128xf32>
      tpu.vector_store %arg3[%c0_16, %c0_17], %17 {strides = array<i32>} : memref<2x128xf32, #tpu.memory_space<vmem>>, vector<2x128xf32>,
      %c0_18 = arith.constant 0 : index
      %c0_19 = arith.constant 0 : index
      %19 = vector.load %arg6[%c0_18, %c0_19] : memref<2x128xf32, #tpu.memory_space<vmem>>, vector<2x128xf32>
      %c0_20 = arith.constant 0 : index
      %c0_21 = arith.constant 0 : index
      %20 = vector.load %arg4[%c0_20, %c0_21] : memref<2x128xf32, #tpu.memory_space<vmem>>, vector<2x128xf32>
      tpu.vector_store %arg4[%c0_20, %c0_21], %19 {strides = array<i32>} : memref<2x128xf32, #tpu.memory_space<vmem>>, vector<2x128xf32>,
    } else {
    }
    return
  }
  func.func @transform_0(%arg0: i32, %arg1: i32) -> (i32, i32, i32) {
    %c0_i32 = arith.constant 0 : i32
    %c0_i32_0 = arith.constant 0 : i32
    return %c0_i32, %arg0, %arg1 : i32, i32, i32
  }
  func.func @transform_1(%arg0: i32, %arg1: i32) -> (i32, i32) {
    %c0_i32 = arith.constant 0 : i32
    %c0_i32_0 = arith.constant 0 : i32
    return %c0_i32, %arg0 : i32, i32
  }
  func.func @transform_2(%arg0: i32, %arg1: i32) -> (i32, i32) {
    %c0_i32 = arith.constant 0 : i32
    %c0_i32_0 = arith.constant 0 : i32
    return %c0_i32, %arg0 : i32, i32
  }
}

</mosaic_0001>

<llo_original>
// kernel: channel_attention.3
$region0: #{channel_attention.3}
  #allocation0 [shape = 'u32[]', space=smem, size = 0x4, offset = 0x4, fixed_abs, tag = 'smem constant byte address 0x4 - core index']
  #allocation1 [shape = 'u32[72,128]{1,0:T(1,128)}', space=vmem, size = 0x9000, scoped, tag = 'internal scratch']
  %s0 = inlined_call_operand.vmem [shape: f32[2,256], index: 0, kind: input, shape index: {}]
  %s1 = inlined_call_operand.vmem [shape: f32[2,256], index: 1, kind: input, shape index: {}]
  %s2 = inlined_call_operand.vmem [shape: f32[256,16], index: 2, kind: input, shape index: {}]
  %s3 = inlined_call_operand.vmem [shape: f32[16,256], index: 3, kind: input, shape index: {}]
  %s4 = inlined_call_operand.vmem [shape: f32[2,256], index: 4, kind: output, shape index: {}]
  %s5 = sld [smem:[#allocation0]]
  $region26: #{channel_attention.3} parent=0
    _
  %s7 = ssub.s32 1, %s5
  %s8 = scalar_select 0, %s7, %s5
  // Predicated region
  $region2: #{channel_attention.3} parent=0 // pred_check
    _
  $region3: #{channel_attention.3} parent=0 // pred_check_branch
    %10 = sbr.rel (0) target = $region5
  $region4: #{channel_attention.3} parent=0 // pred_region
    _
  $region5: #{channel_attention.3} parent=0 // pred_fallthru
    _
  // Predicated region
  $region6: #{channel_attention.3} parent=0 // pred_check
    _
  $region7: #{channel_attention.3} parent=0 // pred_check_branch
    %12 = sbr.rel (0) target = $region9
  $region8: #{channel_attention.3} parent=0 // pred_region
    _
  $region9: #{channel_attention.3} parent=0 // pred_fallthru
    _
  // Predicated region
  $region10: #{channel_attention.3} parent=0 // pred_check
    _
  $region11: #{channel_attention.3} parent=0 // pred_check_branch
    %14 = sbr.rel (0) target = $region13
  $region12: #{channel_attention.3} parent=0 // pred_region
    _
  $region13: #{channel_attention.3} parent=0 // pred_fallthru
    _
  // Predicated region
  $region14: #{channel_attention.3} parent=0 // pred_check
    _
  $region15: #{channel_attention.3} parent=0 // pred_check_branch
    %16 = sbr.rel (0) target = $region17
  $region16: #{channel_attention.3} parent=0 // pred_region
    _
  $region17: #{channel_attention.3} parent=0 // pred_fallthru
    _
  %v17 = vld [vmem:[%s2] sm:$0xff]
  %v18 = vld [vmem:[%s2 + $0x8] sm:$0xff]
  %v19 = vld [vmem:[%s2 + $0x10] sm:$0xff]
  %v20 = vld [vmem:[%s2 + $0x18] sm:$0xff]
  %v21 = vld [vmem:[%s2 + $0x20] sm:$0xff]
  %v22 = vld [vmem:[%s2 + $0x28] sm:$0xff]
  %v23 = vld [vmem:[%s2 + $0x30] sm:$0xff]
  %v24 = vld [vmem:[%s2 + $0x38] sm:$0xff]
  %v25 = vld [vmem:[%s2 + $0x40] sm:$0xff]
  %v26 = vld [vmem:[%s2 + $0x48] sm:$0xff]
  %v27 = vld [vmem:[%s2 + $0x50] sm:$0xff]
  %v28 = vld [vmem:[%s2 + $0x58] sm:$0xff]
  %v29 = vld [vmem:[%s2 + $0x60] sm:$0xff]
  %v30 = vld [vmem:[%s2 + $0x68] sm:$0xff]
  %v31 = vld [vmem:[%s2 + $0x70] sm:$0xff]
  %v32 = vld [vmem:[%s2 + $0x78] sm:$0xff]
  %v33 = vld [vmem:[%s2 + $0x80] sm:$0xff]
  %v34 = vld [vmem:[%s2 + $0x88] sm:$0xff]
  %v35 = vld [vmem:[%s2 + $0x90] sm:$0xff]
  %v36 = vld [vmem:[%s2 + $0x98] sm:$0xff]
  %v37 = vld [vmem:[%s2 + $0xa0] sm:$0xff]
  %v38 = vld [vmem:[%s2 + $0xa8] sm:$0xff]
  %v39 = vld [vmem:[%s2 + $0xb0] sm:$0xff]
  %v40 = vld [vmem:[%s2 + $0xb8] sm:$0xff]
  %v41 = vld [vmem:[%s2 + $0xc0] sm:$0xff]
  %v42 = vld [vmem:[%s2 + $0xc8] sm:$0xff]
  %v43 = vld [vmem:[%s2 + $0xd0] sm:$0xff]
  %v44 = vld [vmem:[%s2 + $0xd8] sm:$0xff]
  %v45 = vld [vmem:[%s2 + $0xe0] sm:$0xff]
  %v46 = vld [vmem:[%s2 + $0xe8] sm:$0xff]
  %v47 = vld [vmem:[%s2 + $0xf0] sm:$0xff]
  %v48 = vld [vmem:[%s2 + $0xf8] sm:$0xff]
  %v49 = vld [vmem:[%s3] sm:$0xff]
  %v50 = vld [vmem:[%s3 + $0x8] sm:$0xff]
  %v51 = vld [vmem:[%s3 + $0x10] sm:$0xff]
  %v52 = vld [vmem:[%s3 + $0x18] sm:$0xff]
  %v53 = vld [vmem:[%s0] sm:$0xf]
  %55 = vst [vmem:[#allocation1] ss:$4 sm:$0xff] %v53
  %v56 = vld.sshfl [vmem:[#allocation1] sm:$0xff pattern:$0x73625140]
  %v57 = vld.sshfl [vmem:[#allocation1 + $0x8] sm:$0xff pattern:$0x73625140]
  %60 = vmatpush.msra.mxu0 %v32
  %61 = vmatpush.msra.mxu0 %v31
  %62 = vmatpush.msra.mxu0 %v30
  %63 = vmatpush.msra.mxu0 %v29
  %64 = vmatpush.msra.mxu0 %v28
  %65 = vmatpush.msra.mxu0 %v27
  %66 = vmatpush.msra.mxu0 %v26
  %67 = vmatpush.msra.mxu0 %v25
  %68 = vmatpush.msra.mxu0 %v24
  %69 = vmatpush.msra.mxu0 %v23
  %70 = vmatpush.msra.mxu0 %v22
  %71 = vmatpush.msra.mxu0 %v21
  %72 = vmatpush.msra.mxu0 %v20
  %73 = vmatpush.msra.mxu0 %v19
  %74 = vmatpush.msra.mxu0 %v18
  %75 = vmatpush.msra.mxu0 %v17
  %76 = vmatmul.f32.gmra.mxu0 %v56
  %v77 = vpop.f32.mrf.mxu0
  %v78 = vadd.f32 0.0, %v77
  %79 = vdwg.mxu0
  %80 = vmatpush.msra.mxu0 %v48
  %81 = vmatpush.msra.mxu0 %v47
  %82 = vmatpush.msra.mxu0 %v46
  %83 = vmatpush.msra.mxu0 %v45
  %84 = vmatpush.msra.mxu0 %v44
  %85 = vmatpush.msra.mxu0 %v43
  %86 = vmatpush.msra.mxu0 %v42
  %87 = vmatpush.msra.mxu0 %v41
  %88 = vmatpush.msra.mxu0 %v40
  %89 = vmatpush.msra.mxu0 %v39
  %90 = vmatpush.msra.mxu0 %v38
  %91 = vmatpush.msra.mxu0 %v37
  %92 = vmatpush.msra.mxu0 %v36
  %93 = vmatpush.msra.mxu0 %v35
  %94 = vmatpush.msra.mxu0 %v34
  %95 = vmatpush.msra.mxu0 %v33
  %96 = vmatmul.f32.gmra.mxu0 %v57
  %v97 = vpop.f32.mrf.mxu0
  %v98 = vadd.f32 %v78, %v97
  %99 = vdwg.mxu0
  %v100 = vmax.f32 %v98, 0.0
  %v101 = vld [vmem:[%s1] sm:$0xf]
  %103 = vst [vmem:[#allocation1] ss:$4 sm:$0xff] %v101
  %v104 = vld.sshfl [vmem:[#allocation1] sm:$0xff pattern:$0x73625140]
  %v105 = vld.sshfl [vmem:[#allocation1 + $0x8] sm:$0xff pattern:$0x73625140]
  %108 = vmatpush.msra.mxu0 %v32
  %109 = vmatpush.msra.mxu0 %v31
  %110 = vmatpush.msra.mxu0 %v30
  %111 = vmatpush.msra.mxu0 %v29
  %112 = vmatpush.msra.mxu0 %v28
  %113 = vmatpush.msra.mxu0 %v27
  %114 = vmatpush.msra.mxu0 %v26
  %115 = vmatpush.msra.mxu0 %v25
  %116 = vmatpush.msra.mxu0 %v24
  %117 = vmatpush.msra.mxu0 %v23
  %118 = vmatpush.msra.mxu0 %v22
  %119 = vmatpush.msra.mxu0 %v21
  %120 = vmatpush.msra.mxu0 %v20
  %121 = vmatpush.msra.mxu0 %v19
  %122 = vmatpush.msra.mxu0 %v18
  %123 = vmatpush.msra.mxu0 %v17
  %124 = vmatmul.f32.gmra.mxu0 %v104
  %v125 = vpop.f32.mrf.mxu0
  %v126 = vadd.f32 0.0, %v125
  %127 = vdwg.mxu0
  %128 = vmatpush.msra.mxu0 %v48
  %129 = vmatpush.msra.mxu0 %v47
  %130 = vmatpush.msra.mxu0 %v46
  %131 = vmatpush.msra.mxu0 %v45
  %132 = vmatpush.msra.mxu0 %v44
  %133 = vmatpush.msra.mxu0 %v43
  %134 = vmatpush.msra.mxu0 %v42
  %135 = vmatpush.msra.mxu0 %v41
  %136 = vmatpush.msra.mxu0 %v40
  %137 = vmatpush.msra.mxu0 %v39
  %138 = vmatpush.msra.mxu0 %v38
  %139 = vmatpush.msra.mxu0 %v37
  %140 = vmatpush.msra.mxu0 %v36
  %141 = vmatpush.msra.mxu0 %v35
  %142 = vmatpush.msra.mxu0 %v34
  %143 = vmatpush.msra.mxu0 %v33
  %144 = vmatmul.f32.gmra.mxu0 %v105
  %v145 = vpop.f32.mrf.mxu0
  %v146 = vadd.f32 %v126, %v145
  %147 = vdwg.mxu0
  %v148 = vmax.f32 %v146, 0.0
  %vm149 = vcmask 130048
  %v151 = vsel %vm149, %v148, 0
  %153 = vmatpush.msra.mxu0 0.0
  %154 = vmatpush.msra.mxu0 0.0
  %155 = vmatpush.msra.mxu0 0.0
  %156 = vmatpush.msra.mxu0 0.0
  %157 = vmatpush.msra.mxu0 0.0
  %158 = vmatpush.msra.mxu0 0.0
  %159 = vmatpush.msra.mxu0 0.0
  %160 = vmatpush.msra.mxu0 0.0
  %161 = vmatpush.msra.mxu0 0.0
  %162 = vmatpush.msra.mxu0 0.0
  %163 = vmatpush.msra.mxu0 0.0
  %164 = vmatpush.msra.mxu0 0.0
  %165 = vmatpush.msra.mxu0 0.0
  %166 = vmatpush.msra.mxu0 0.0
  %167 = vmatpush.msra.mxu0 %v51
  %168 = vmatpush.msra.mxu0 %v49
  %169 = vmatmul.f32.gmra.mxu0 %v151
  %v170 = vpop.f32.mrf.mxu0
  %v171 = vadd.f32 0.0, %v170
  %172 = vdwg.mxu0
  %173 = vmatpush.msra.mxu0 0.0
  %174 = vmatpush.msra.mxu0 0.0
  %175 = vmatpush.msra.mxu0 0.0
  %176 = vmatpush.msra.mxu0 0.0
  %177 = vmatpush.msra.mxu0 0.0
  %178 = vmatpush.msra.mxu0 0.0
  %179 = vmatpush.msra.mxu0 0.0
  %180 = vmatpush.msra.mxu0 0.0
  %181 = vmatpush.msra.mxu0 0.0
  %182 = vmatpush.msra.mxu0 0.0
  %183 = vmatpush.msra.mxu0 0.0
  %184 = vmatpush.msra.mxu0 0.0
  %185 = vmatpush.msra.mxu0 0.0
  %186 = vmatpush.msra.mxu0 0.0
  %187 = vmatpush.msra.mxu0 %v52
  %188 = vmatpush.msra.mxu0 %v50
  %189 = vmatmul.f32.gmra.mxu0 %v151
  %v190 = vpop.f32.mrf.mxu0
  %v191 = vadd.f32 0.0, %v190
  %192 = vdwg.mxu0
  %v194 = vsel %vm149, %v100, 0
  %196 = vmatpush.msra.mxu0 0.0
  %197 = vmatpush.msra.mxu0 0.0
  %198 = vmatpush.msra.mxu0 0.0
  %199 = vmatpush.msra.mxu0 0.0
  %200 = vmatpush.msra.mxu0 0.0
  %201 = vmatpush.msra.mxu0 0.0
  %202 = vmatpush.msra.mxu0 0.0
  %203 = vmatpush.msra.mxu0 0.0
  %204 = vmatpush.msra.mxu0 0.0
  %205 = vmatpush.msra.mxu0 0.0
  %206 = vmatpush.msra.mxu0 0.0
  %207 = vmatpush.msra.mxu0 0.0
  %208 = vmatpush.msra.mxu0 0.0
  %209 = vmatpush.msra.mxu0 0.0
  %210 = vmatpush.msra.mxu0 %v51
  %211 = vmatpush.msra.mxu0 %v49
  %212 = vmatmul.f32.gmra.mxu0 %v194
  %v213 = vpop.f32.mrf.mxu0
  %v214 = vadd.f32 %v171, %v213
  %215 = vdwg.mxu0
  %216 = vmatpush.msra.mxu0 0.0
  %217 = vmatpush.msra.mxu0 0.0
  %218 = vmatpush.msra.mxu0 0.0
  %219 = vmatpush.msra.mxu0 0.0
  %220 = vmatpush.msra.mxu0 0.0
  %221 = vmatpush.msra.mxu0 0.0
  %222 = vmatpush.msra.mxu0 0.0
  %223 = vmatpush.msra.mxu0 0.0
  %224 = vmatpush.msra.mxu0 0.0
  %225 = vmatpush.msra.mxu0 0.0
  %226 = vmatpush.msra.mxu0 0.0
  %227 = vmatpush.msra.mxu0 0.0
  %228 = vmatpush.msra.mxu0 0.0
  %229 = vmatpush.msra.mxu0 0.0
  %230 = vmatpush.msra.mxu0 %v52
  %231 = vmatpush.msra.mxu0 %v50
  %232 = vmatmul.f32.gmra.mxu0 %v194
  %v233 = vpop.f32.mrf.mxu0
  %v234 = vadd.f32 %v191, %v233
  %235 = vdwg.mxu0
  %v236 = vxor.u32 %v214, 2147483648
  %v237 = vxor.u32 %v234, 2147483648
  %v238 = vmul.f32 %v236, 1.442695
  %v239 = vpow.pop %v238
  %v240 = vmul.f32 %v237, 1.442695
  %v241 = vpow.pop %v240
  %v242 = vadd.f32 %v239, 1.0
  %v243 = vadd.f32 %v241, 1.0
  %v244 = vrcp.pop %v242
  %v245 = vmul.f32 %v242, %v244
  %v246 = vsub.f32 1.0, %v245
  %v247 = vmul.f32 %v244, %v246
  %v248 = vadd.f32 %v244, %v247
  %vm249 = vweird.f32 %v242
  %vm250 = vweird.f32 %v244
  %vm251 = vmor %vm249, %vm250
  %v252 = vsel %vm251, %v244, %v248
  %v253 = vand.u32 2147483647, %v242
  %vm254 = vcmp.eq.f32.partialorder %v253, 8.507059e+37
  %v255 = vand.u32 %v242, 2147483648
  %v256 = vor.u32 1.1754944e-38, %v255
  %v257 = vsel %vm254, %v256, %v252
  %v258 = vmul.f32 1.0, %v257
  %v259 = vrcp.pop %v243
  %v260 = vmul.f32 %v243, %v259
  %v261 = vsub.f32 1.0, %v260
  %v262 = vmul.f32 %v259, %v261
  %v263 = vadd.f32 %v259, %v262
  %vm264 = vweird.f32 %v243
  %vm265 = vweird.f32 %v259
  %vm266 = vmor %vm264, %vm265
  %v267 = vsel %vm266, %v259, %v263
  %v268 = vand.u32 2147483647, %v243
  %vm269 = vcmp.eq.f32.partialorder %v268, 8.507059e+37
  %v270 = vand.u32 %v243, 2147483648
  %v271 = vor.u32 1.1754944e-38, %v270
  %v272 = vsel %vm269, %v271, %v267
  %v273 = vmul.f32 1.0, %v272
  %v276 = vrot.slane %v273, 6
  %vm277 = vcmask 1041408
  %v278 = vsel %vm277, %v258, %v276
  %280 = vst [vmem:[%s4] sm:$0xf] %v278
  // Predicated region
  $region18: #{channel_attention.3} parent=0 // pred_check
    _
  $region19: #{channel_attention.3} parent=0 // pred_check_branch
    %282 = sbr.rel (0) target = $region21
  $region20: #{channel_attention.3} parent=0 // pred_region
    _
  $region21: #{channel_attention.3} parent=0 // pred_fallthru
    _
  // Predicated region
  $region22: #{channel_attention.3} parent=0 // pred_check
    _
  $region23: #{channel_attention.3} parent=0 // pred_check_branch
    %284 = sbr.rel (0) target = $region25
  $region24: #{channel_attention.3} parent=0 // pred_region
    _
  $region25: #{channel_attention.3} parent=0 // pred_fallthru
    _

// kernel: channel_attention.2
$region0: #{channel_attention.2}
  #allocation0 [shape = 'u32[]', space=smem, size = 0x4, offset = 0x4, fixed_abs, tag = 'smem constant byte address 0x4 - core index']
  #allocation1 [shape = 'u32[72,128]{1,0:T(1,128)}', space=vmem, size = 0x9000, scoped, tag = 'internal scratch']
  #allocation2 [shape = 'f32[2,128]{1,0:T(2,128)}', space=vmem, size = 0x400, scoped, tag = 'scratch operand']
  #allocation3 [shape = 'f32[2,128]{1,0:T(2,128)}', space=vmem, size = 0x400, scoped, tag = 'scratch operand']
  %s0 = inlined_call_operand.vmem [shape: f32[2,256,1024], index: 0, kind: input, shape index: {}]
  %s1 = inlined_call_operand.vmem [shape: f32[2,256], index: 1, kind: output, shape index: {0}]
  %s2 = inlined_call_operand.vmem [shape: f32[2,256], index: 2, kind: output, shape index: {1}]
  %3 = xla_tuple %s1, %s2
  %s4 = sld [smem:[#allocation0]]
  $region76: #{channel_attention.2} parent=0
    _
  %s6 = ssub.s32 1, %s4
  %s7 = scalar_select 0, %s6, %s4
  $region1: #{channel_attention.2} parent=0
    #allocation4 [shape = 'u8[1048576]{0}', space=vmem, size = 0x100000, scoped, tag = 'input window, operand 0']
    loop: start=0, step=1, limit=6
    $region2: #{channel_attention.2} parent=1 // loop_pre_header
      _
    $region3: #{channel_attention.2} parent=1 // loop_header
      %s9 = sphi 0, %s13
      %p10 = scmp.ge.s32.totalorder %s9, 6
      %s16 = sphi 0, %s28
      %s17 = sphi 0, %s24
      %s18 = sphi 0, %s16
      %s19 = sphi 0, %s17
      %s20 = sphi 0, %s18
      %s21 = sphi 0, %s19
      %s33 = sphi 0, %s35
      %s36 = sphi 0, %s33
      %s37 = sphi 0, %s36
      %s53 = sphi 0, %s37
      %s59 = sphi 0, %s61
      %s62 = sphi 0, %s59
      %s63 = sphi 0, %s62
      %s79 = sphi 0, %s63
      %s85 = sphi 0, %s87
      %s88 = sphi 0, %s85
      %s89 = sphi 0, %s88
      %s105 = sphi 0, %s89
    $region4: #{channel_attention.2} parent=1 // loop_header_branch
      %12 = sbr.rel (%p10) target = $region8
    $region5: #{channel_attention.2} parent=1 // loop_body
      %s14 = ssub.s32 %s9, 1
      %s15 = ssub.s32 %s9, 2
      %s22 = sadd.s32 1, %s17
      %p23 = scmp.ge.s32.totalorder %s22, 2
      %s24 = scalar_select %p23, 0, %s22
      %s25 = sadd.s32 1, %s16
      %s26 = scalar_select %p23, %s25, %s16
      %p27 = scmp.ge.s32.totalorder %s26, 2
      %s28 = scalar_select %p27, 0, %s26
      %s29 = ssub.s32 %s16, %s28
      %s30 = ssub.s32 %s17, %s24
      %s31 = sor.u32 %s29, %s30
      %p32 = scmp.eq.s32.totalorder %s31, 0
      %s34 = sadd.s32 %s33, 1
      %s35 = scalar_select %p32, %s33, %s34
      %p38 = pneg %p32
      %p39 = scmp.eq.s32.totalorder %s9, 3
      %p40 = por %p38, %p39
      %p41 = scmp.ne.s32.totalorder %s33, %s36
      %p42 = scmp.eq.s32.totalorder %s9, 0
      %p43 = por %p41, %p42
      %p44 = scmp.ne.s32.totalorder %s33, %s36
      %p45 = scmp.eq.s32.totalorder %s14, 3
      %p46 = por %p44, %p45
      %p47 = scmp.ne.s32.totalorder %s36, %s37
      %p48 = scmp.eq.s32.totalorder %s14, 0
      %p49 = por %p47, %p48
      %p50 = scmp.ne.s32.totalorder %s36, %s37
      %p51 = scmp.eq.s32.totalorder %s15, 3
      %p52 = por %p50, %p51
      %p54 = scmp.ne.s32.totalorder %s37, %s53
      %p55 = scmp.eq.s32.totalorder %s15, 0
      %p56 = por %p54, %p55
      %s57 = ssub.s32 %s16, %s28
      %p58 = scmp.eq.s32.totalorder %s57, 0
      %s60 = sadd.s32 %s59, 1
      %s61 = scalar_select %p58, %s59, %s60
      %p64 = pneg %p58
      %p65 = scmp.eq.s32.totalorder %s9, 3
      %p66 = por %p64, %p65
      %p67 = scmp.ne.s32.totalorder %s59, %s62
      %p68 = scmp.eq.s32.totalorder %s9, 0
      %p69 = por %p67, %p68
      %p70 = scmp.ne.s32.totalorder %s59, %s62
      %p71 = scmp.eq.s32.totalorder %s14, 3
      %p72 = por %p70, %p71
      %p73 = scmp.ne.s32.totalorder %s62, %s63
      %p74 = scmp.eq.s32.totalorder %s14, 0
      %p75 = por %p73, %p74
      %p76 = scmp.ne.s32.totalorder %s62, %s63
      %p77 = scmp.eq.s32.totalorder %s15, 3
      %p78 = por %p76, %p77
      %p80 = scmp.ne.s32.totalorder %s63, %s79
      %p81 = scmp.eq.s32.totalorder %s15, 0
      %p82 = por %p80, %p81
      %s83 = ssub.s32 %s16, %s28
      %p84 = scmp.eq.s32.totalorder %s83, 0
      %s86 = sadd.s32 %s85, 1
      %s87 = scalar_select %p84, %s85, %s86
      %p90 = pneg %p84
      %p91 = scmp.eq.s32.totalorder %s9, 3
      %p92 = por %p90, %p91
      %p93 = scmp.ne.s32.totalorder %s85, %s88
      %p94 = scmp.eq.s32.totalorder %s9, 0
      %p95 = por %p93, %p94
      %p96 = scmp.ne.s32.totalorder %s85, %s88
      %p97 = scmp.eq.s32.totalorder %s14, 3
      %p98 = por %p96, %p97
      %p99 = scmp.ne.s32.totalorder %s88, %s89
      %p100 = scmp.eq.s32.totalorder %s14, 0
      %p101 = por %p99, %p100
      %p102 = scmp.ne.s32.totalorder %s88, %s89
      %p103 = scmp.eq.s32.totalorder %s15, 3
      %p104 = por %p102, %p103
      %p106 = scmp.ne.s32.totalorder %s89, %s105
      %p107 = scmp.eq.s32.totalorder %s15, 0
      %p108 = por %p106, %p107
      %p109 = scmp.le.s32.totalorder 1, %s9
      %p110 = scmp.lt.s32.totalorder %s9, 5
      %p111 = pnand %p109, %p110
      %p112 = pneg %p111
      // Predicated region
      $region9: #{channel_attention.2} parent=5 // pred_check
        _
      $region10: #{channel_attention.2} parent=5 // pred_check_branch
        %114 = sbr.rel (%p111) target = $region12
      $region11: #{channel_attention.2} parent=5 // pred_region
        %s115 = ssub.s32 %s9, 1
      $region12: #{channel_attention.2} parent=5 // pred_fallthru
        _
      %p116 = scmp.lt.s32.totalorder %s9, 4
      // Predicated region
      $region13: #{channel_attention.2} parent=5 // pred_check
        %p117 = pneg %p116
      $region14: #{channel_attention.2} parent=5 // pred_check_branch
        %119 = sbr.rel (%p117) target = $region16
      $region15: #{channel_attention.2} parent=5 // pred_region
        // Predicated region
        $region17: #{channel_attention.2} parent=15 // pred_check
          %p120 = pneg %p43
        $region18: #{channel_attention.2} parent=15 // pred_check_branch
          %122 = sbr.rel (%p120) target = $region20
        $region19: #{channel_attention.2} parent=15 // pred_region
          %s123 = sand.u32 %s33, 1
          %s124 = sand.u32 %s33, 1
          %s125 = smul.addr %s124, 1024
          %s126 = scalar_lea.vmem [#allocation4], %s125
          %s127 = smul.u32 16, %s16
          %s128 = smul.u32 4, %s17
          %s129 = smul.addr %s127, 8
          %s130 = sadd.s32 %s128, %s129
          %s131 = smul.addr %s130, 8
          %s132 = scalar_lea.vmem %s0, %s131
          // Predicated region
          $region21: #{channel_attention.2} parent=19 // pred_check
            _
          $region22: #{channel_attention.2} parent=19 // pred_check_branch
            %134 = sbr.rel (0) target = $region24
          $region23: #{channel_attention.2} parent=19 // pred_region
            // Predicated region
            $region25: #{channel_attention.2} parent=23 // pred_check
              _
            $region26: #{channel_attention.2} parent=23 // pred_check_branch
              %136 = sbr.rel (0) target = $region28
            $region27: #{channel_attention.2} parent=23 // pred_region
              loop: start=0, step=1, limit=1
              $region29: #{channel_attention.2} parent=27 // loop_pre_header
                _
              $region30: #{channel_attention.2} parent=27 // loop_header
                %s138 = sphi 0, %s142
                %p139 = scmp.ge.s32.totalorder %s138, 1
                %s143 = sphi %s132, %s132
                %s144 = sphi %s126, %s126
              $region31: #{channel_attention.2} parent=27 // loop_header_branch
                %141 = sbr.rel (%p139) target = $region35
              $region32: #{channel_attention.2} parent=27 // loop_body
                %v145 = vld [vmem:[%s143] sm:$0xff]
                %146 = vst [vmem:[%s144] sm:$0xff] %v145
                %v147 = vld [vmem:[%s143 + $0x8] sm:$0xff]
                %148 = vst [vmem:[%s144 + $0x8] sm:$0xff] %v147
                %v149 = vld [vmem:[%s143 + $0x10] sm:$0xff]
                %150 = vst [vmem:[%s144 + $0x10] sm:$0xff] %v149
                %v151 = vld [vmem:[%s143 + $0x18] sm:$0xff]
                %152 = vst [vmem:[%s144 + $0x18] sm:$0xff] %v151
                %v153 = vld [vmem:[%s143 + $0x40] sm:$0xff]
                %154 = vst [vmem:[%s144 + $0x20] sm:$0xff] %v153
                %v155 = vld [vmem:[%s143 + $0x48] sm:$0xff]
                %156 = vst [vmem:[%s144 + $0x28] sm:$0xff] %v155
                %v157 = vld [vmem:[%s143 + $0x50] sm:$0xff]
                %158 = vst [vmem:[%s144 + $0x30] sm:$0xff] %v157
                %v159 = vld [vmem:[%s143 + $0x58] sm:$0xff]
                %160 = vst [vmem:[%s144 + $0x38] sm:$0xff] %v159
                %v161 = vld [vmem:[%s143 + $0x80] sm:$0xff]
                %162 = vst [vmem:[%s144 + $0x40] sm:$0xff] %v161
                %v163 = vld [vmem:[%s143 + $0x88] sm:$0xff]
                %164 = vst [vmem:[%s144 + $0x48] sm:$0xff] %v163
                %v165 = vld [vmem:[%s143 + $0x90] sm:$0xff]
                %166 = vst [vmem:[%s144 + $0x50] sm:$0xff] %v165
                %v167 = vld [vmem:[%s143 + $0x98] sm:$0xff]
                %168 = vst [vmem:[%s144 + $0x58] sm:$0xff] %v167
                %v169 = vld [vmem:[%s143 + $0xc0] sm:$0xff]
                %170 = vst [vmem:[%s144 + $0x60] sm:$0xff] %v169
                %v171 = vld [vmem:[%s143 + $0xc8] sm:$0xff]
                %172 = vst [vmem:[%s144 + $0x68] sm:$0xff] %v171
                %v173 = vld [vmem:[%s143 + $0xd0] sm:$0xff]
                %174 = vst [vmem:[%s144 + $0x70] sm:$0xff] %v173
                %v175 = vld [vmem:[%s143 + $0xd8] sm:$0xff]
                %176 = vst [vmem:[%s144 + $0x78] sm:$0xff] %v175
                %v177 = vld [vmem:[%s143 + $0x100] sm:$0xff]
                %178 = vst [vmem:[%s144 + $0x80] sm:$0xff] %v177
                %v179 = vld [vmem:[%s143 + $0x108] sm:$0xff]
                %180 = vst [vmem:[%s144 + $0x88] sm:$0xff] %v179
                %v181 = vld [vmem:[%s143 + $0x110] sm:$0xff]
                %182 = vst [vmem:[%s144 + $0x90] sm:$0xff] %v181
                %v183 = vld [vmem:[%s143 + $0x118] sm:$0xff]
                %184 = vst [vmem:[%s144 + $0x98] sm:$0xff] %v183
                %v185 = vld [vmem:[%s143 + $0x140] sm:$0xff]
                %186 = vst [vmem:[%s144 + $0xa0] sm:$0xff] %v185
                %v187 = vld [vmem:[%s143 + $0x148] sm:$0xff]
                %188 = vst [vmem:[%s144 + $0xa8] sm:$0xff] %v187
                %v189 = vld [vmem:[%s143 + $0x150] sm:$0xff]
                %190 = vst [vmem:[%s144 + $0xb0] sm:$0xff] %v189
                %v191 = vld [vmem:[%s143 + $0x158] sm:$0xff]
                %192 = vst [vmem:[%s144 + $0xb8] sm:$0xff] %v191
                %v193 = vld [vmem:[%s143 + $0x180] sm:$0xff]
                %194 = vst [vmem:[%s144 + $0xc0] sm:$0xff] %v193
                %v195 = vld [vmem:[%s143 + $0x188] sm:$0xff]
                %196 = vst [vmem:[%s144 + $0xc8] sm:$0xff] %v195
                %v197 = vld [vmem:[%s143 + $0x190] sm:$0xff]
                %198 = vst [vmem:[%s144 + $0xd0] sm:$0xff] %v197
                %v199 = vld [vmem:[%s143 + $0x198] sm:$0xff]
                %200 = vst [vmem:[%s144 + $0xd8] sm:$0xff] %v199
                %v201 = vld [vmem:[%s143 + $0x1c0] sm:$0xff]
                %202 = vst [vmem:[%s144 + $0xe0] sm:$0xff] %v201
                %v203 = vld [vmem:[%s143 + $0x1c8] sm:$0xff]
                %204 = vst [vmem:[%s144 + $0xe8] sm:$0xff] %v203
                %v205 = vld [vmem:[%s143 + $0x1d0] sm:$0xff]
                %206 = vst [vmem:[%s144 + $0xf0] sm:$0xff] %v205
                %v207 = vld [vmem:[%s143 + $0x1d8] sm:$0xff]
                %208 = vst [vmem:[%s144 + $0xf8] sm:$0xff] %v207
                %v209 = vld [vmem:[%s143 + $0x200] sm:$0xff]
                %210 = vst [vmem:[%s144 + $0x100] sm:$0xff] %v209
                %v211 = vld [vmem:[%s143 + $0x208] sm:$0xff]
                %212 = vst [vmem:[%s144 + $0x108] sm:$0xff] %v211
                %v213 = vld [vmem:[%s143 + $0x210] sm:$0xff]
                %214 = vst [vmem:[%s144 + $0x110] sm:$0xff] %v213
                %v215 = vld [vmem:[%s143 + $0x218] sm:$0xff]
                %216 = vst [vmem:[%s144 + $0x118] sm:$0xff] %v215
                %v217 = vld [vmem:[%s143 + $0x240] sm:$0xff]
                %218 = vst [vmem:[%s144 + $0x120] sm:$0xff] %v217
                %v219 = vld [vmem:[%s143 + $0x248] sm:$0xff]
                %220 = vst [vmem:[%s144 + $0x128] sm:$0xff] %v219
                %v221 = vld [vmem:[%s143 + $0x250] sm:$0xff]
                %222 = vst [vmem:[%s144 + $0x130] sm:$0xff] %v221
                %v223 = vld [vmem:[%s143 + $0x258] sm:$0xff]
                %224 = vst [vmem:[%s144 + $0x138] sm:$0xff] %v223
                %v225 = vld [vmem:[%s143 + $0x280] sm:$0xff]
                %226 = vst [vmem:[%s144 + $0x140] sm:$0xff] %v225
                %v227 = vld [vmem:[%s143 + $0x288] sm:$0xff]
                %228 = vst [vmem:[%s144 + $0x148] sm:$0xff] %v227
                %v229 = vld [vmem:[%s143 + $0x290] sm:$0xff]
                %230 = vst [vmem:[%s144 + $0x150] sm:$0xff] %v229
                %v231 = vld [vmem:[%s143 + $0x298] sm:$0xff]
                %232 = vst [vmem:[%s144 + $0x158] sm:$0xff] %v231
                %v233 = vld [vmem:[%s143 + $0x2c0] sm:$0xff]
                %234 = vst [vmem:[%s144 + $0x160] sm:$0xff] %v233
                %v235 = vld [vmem:[%s143 + $0x2c8] sm:$0xff]
                %236 = vst [vmem:[%s144 + $0x168] sm:$0xff] %v235
                %v237 = vld [vmem:[%s143 + $0x2d0] sm:$0xff]
                %238 = vst [vmem:[%s144 + $0x170] sm:$0xff] %v237
                %v239 = vld [vmem:[%s143 + $0x2d8] sm:$0xff]
                %240 = vst [vmem:[%s144 + $0x178] sm:$0xff] %v239
                %v241 = vld [vmem:[%s143 + $0x300] sm:$0xff]
                %242 = vst [vmem:[%s144 + $0x180] sm:$0xff] %v241
                %v243 = vld [vmem:[%s143 + $0x308] sm:$0xff]
                %244 = vst [vmem:[%s144 + $0x188] sm:$0xff] %v243
                %v245 = vld [vmem:[%s143 + $0x310] sm:$0xff]
                %246 = vst [vmem:[%s144 + $0x190] sm:$0xff] %v245
                %v247 = vld [vmem:[%s143 + $0x318] sm:$0xff]
                %248 = vst [vmem:[%s144 + $0x198] sm:$0xff] %v247
                %v249 = vld [vmem:[%s143 + $0x340] sm:$0xff]
                %250 = vst [vmem:[%s144 + $0x1a0] sm:$0xff] %v249
                %v251 = vld [vmem:[%s143 + $0x348] sm:$0xff]
                %252 = vst [vmem:[%s144 + $0x1a8] sm:$0xff] %v251
                %v253 = vld [vmem:[%s143 + $0x350] sm:$0xff]
                %254 = vst [vmem:[%s144 + $0x1b0] sm:$0xff] %v253
                %v255 = vld [vmem:[%s143 + $0x358] sm:$0xff]
                %256 = vst [vmem:[%s144 + $0x1b8] sm:$0xff] %v255
                %v257 = vld [vmem:[%s143 + $0x380] sm:$0xff]
                %258 = vst [vmem:[%s144 + $0x1c0] sm:$0xff] %v257
                %v259 = vld [vmem:[%s143 + $0x388] sm:$0xff]
                %260 = vst [vmem:[%s144 + $0x1c8] sm:$0xff] %v259
                %v261 = vld [vmem:[%s143 + $0x390] sm:$0xff]
                %262 = vst [vmem:[%s144 + $0x1d0] sm:$0xff] %v261
                %v263 = vld [vmem:[%s143 + $0x398] sm:$0xff]
                %264 = vst [vmem:[%s144 + $0x1d8] sm:$0xff] %v263
                %v265 = vld [vmem:[%s143 + $0x3c0] sm:$0xff]
                %266 = vst [vmem:[%s144 + $0x1e0] sm:$0xff] %v265
                %v267 = vld [vmem:[%s143 + $0x3c8] sm:$0xff]
                %268 = vst [vmem:[%s144 + $0x1e8] sm:$0xff] %v267
                %v269 = vld [vmem:[%s143 + $0x3d0] sm:$0xff]
                %270 = vst [vmem:[%s144 + $0x1f0] sm:$0xff] %v269
                %v271 = vld [vmem:[%s143 + $0x3d8] sm:$0xff]
                %272 = vst [vmem:[%s144 + $0x1f8] sm:$0xff] %v271
                %v273 = vld [vmem:[%s143 + $0x800] sm:$0xff]
                %274 = vst [vmem:[%s144 + $0x200] sm:$0xff] %v273
                %v275 = vld [vmem:[%s143 + $0x808] sm:$0xff]
                %276 = vst [vmem:[%s144 + $0x208] sm:$0xff] %v275
                %v277 = vld [vmem:[%s143 + $0x810] sm:$0xff]
                %278 = vst [vmem:[%s144 + $0x210] sm:$0xff] %v277
                %v279 = vld [vmem:[%s143 + $0x818] sm:$0xff]
                %280 = vst [vmem:[%s144 + $0x218] sm:$0xff] %v279
                %v281 = vld [vmem:[%s143 + $0x840] sm:$0xff]
                %282 = vst [vmem:[%s144 + $0x220] sm:$0xff] %v281
                %v283 = vld [vmem:[%s143 + $0x848] sm:$0xff]
                %284 = vst [vmem:[%s144 + $0x228] sm:$0xff] %v283
                %v285 = vld [vmem:[%s143 + $0x850] sm:$0xff]
                %286 = vst [vmem:[%s144 + $0x230] sm:$0xff] %v285
                %v287 = vld [vmem:[%s143 + $0x858] sm:$0xff]
                %288 = vst [vmem:[%s144 + $0x238] sm:$0xff] %v287
                %v289 = vld [vmem:[%s143 + $0x880] sm:$0xff]
                %290 = vst [vmem:[%s144 + $0x240] sm:$0xff] %v289
                %v291 = vld [vmem:[%s143 + $0x888] sm:$0xff]
                %292 = vst [vmem:[%s144 + $0x248] sm:$0xff] %v291
                %v293 = vld [vmem:[%s143 + $0x890] sm:$0xff]
                %294 = vst [vmem:[%s144 + $0x250] sm:$0xff] %v293
                %v295 = vld [vmem:[%s143 + $0x898] sm:$0xff]
                %296 = vst [vmem:[%s144 + $0x258] sm:$0xff] %v295
                %v297 = vld [vmem:[%s143 + $0x8c0] sm:$0xff]
                %298 = vst [vmem:[%s144 + $0x260] sm:$0xff] %v297
                %v299 = vld [vmem:[%s143 + $0x8c8] sm:$0xff]
                %300 = vst [vmem:[%s144 + $0x268] sm:$0xff] %v299
                %v301 = vld [vmem:[%s143 + $0x8d0] sm:$0xff]
                %302 = vst [vmem:[%s144 + $0x270] sm:$0xff] %v301
                %v303 = vld [vmem:[%s143 + $0x8d8] sm:$0xff]
                %304 = vst [vmem:[%s144 + $0x278] sm:$0xff] %v303
                %v305 = vld [vmem:[%s143 + $0x900] sm:$0xff]
                %306 = vst [vmem:[%s144 + $0x280] sm:$0xff] %v305
                %v307 = vld [vmem:[%s143 + $0x908] sm:$0xff]
                %308 = vst [vmem:[%s144 + $0x288] sm:$0xff] %v307
                %v309 = vld [vmem:[%s143 + $0x910] sm:$0xff]
                %310 = vst [vmem:[%s144 + $0x290] sm:$0xff] %v309
                %v311 = vld [vmem:[%s143 + $0x918] sm:$0xff]
                %312 = vst [vmem:[%s144 + $0x298] sm:$0xff] %v311
                %v313 = vld [vmem:[%s143 + $0x940] sm:$0xff]
                %314 = vst [vmem:[%s144 + $0x2a0] sm:$0xff] %v313
                %v315 = vld [vmem:[%s143 + $0x948] sm:$0xff]
                %316 = vst [vmem:[%s144 + $0x2a8] sm:$0xff] %v315
                %v317 = vld [vmem:[%s143 + $0x950] sm:$0xff]
                %318 = vst [vmem:[%s144 + $0x2b0] sm:$0xff] %v317
                %v319 = vld [vmem:[%s143 + $0x958] sm:$0xff]
                %320 = vst [vmem:[%s144 + $0x2b8] sm:$0xff] %v319
                %v321 = vld [vmem:[%s143 + $0x980] sm:$0xff]
                %322 = vst [vmem:[%s144 + $0x2c0] sm:$0xff] %v321
                %v323 = vld [vmem:[%s143 + $0x988] sm:$0xff]
                %324 = vst [vmem:[%s144 + $0x2c8] sm:$0xff] %v323
                %v325 = vld [vmem:[%s143 + $0x990] sm:$0xff]
                %326 = vst [vmem:[%s144 + $0x2d0] sm:$0xff] %v325
                %v327 = vld [vmem:[%s143 + $0x998] sm:$0xff]
                %328 = vst [vmem:[%s144 + $0x2d8] sm:$0xff] %v327
                %v329 = vld [vmem:[%s143 + $0x9c0] sm:$0xff]
                %330 = vst [vmem:[%s144 + $0x2e0] sm:$0xff] %v329
                %v331 = vld [vmem:[%s143 + $0x9c8] sm:$0xff]
                %332 = vst [vmem:[%s144 + $0x2e8] sm:$0xff] %v331
                %v333 = vld [vmem:[%s143 + $0x9d0] sm:$0xff]
                %334 = vst [vmem:[%s144 + $0x2f0] sm:$0xff] %v333
                %v335 = vld [vmem:[%s143 + $0x9d8] sm:$0xff]
                %336 = vst [vmem:[%s144 + $0x2f8] sm:$0xff] %v335
                %v337 = vld [vmem:[%s143 + $0xa00] sm:$0xff]
                %338 = vst [vmem:[%s144 + $0x300] sm:$0xff] %v337
                %v339 = vld [vmem:[%s143 + $0xa08] sm:$0xff]
                %340 = vst [vmem:[%s144 + $0x308] sm:$0xff] %v339
                %v341 = vld [vmem:[%s143 + $0xa10] sm:$0xff]
                %342 = vst [vmem:[%s144 + $0x310] sm:$0xff] %v341
                %v343 = vld [vmem:[%s143 + $0xa18] sm:$0xff]
                %344 = vst [vmem:[%s144 + $0x318] sm:$0xff] %v343
                %v345 = vld [vmem:[%s143 + $0xa40] sm:$0xff]
                %346 = vst [vmem:[%s144 + $0x320] sm:$0xff] %v345
                %v347 = vld [vmem:[%s143 + $0xa48] sm:$0xff]
                %348 = vst [vmem:[%s144 + $0x328] sm:$0xff] %v347
                %v349 = vld [vmem:[%s143 + $0xa50] sm:$0xff]
                %350 = vst [vmem:[%s144 + $0x330] sm:$0xff] %v349
                %v351 = vld [vmem:[%s143 + $0xa58] sm:$0xff]
                %352 = vst [vmem:[%s144 + $0x338] sm:$0xff] %v351
                %v353 = vld [vmem:[%s143 + $0xa80] sm:$0xff]
                %354 = vst [vmem:[%s144 + $0x340] sm:$0xff] %v353
                %v355 = vld [vmem:[%s143 + $0xa88] sm:$0xff]
                %356 = vst [vmem:[%s144 + $0x348] sm:$0xff] %v355
                %v357 = vld [vmem:[%s143 + $0xa90] sm:$0xff]
                %358 = vst [vmem:[%s144 + $0x350] sm:$0xff] %v357
                %v359 = vld [vmem:[%s143 + $0xa98] sm:$0xff]
                %360 = vst [vmem:[%s144 + $0x358] sm:$0xff] %v359
                %v361 = vld [vmem:[%s143 + $0xac0] sm:$0xff]
                %362 = vst [vmem:[%s144 + $0x360] sm:$0xff] %v361
                %v363 = vld [vmem:[%s143 + $0xac8] sm:$0xff]
                %364 = vst [vmem:[%s144 + $0x368] sm:$0xff] %v363
                %v365 = vld [vmem:[%s143 + $0xad0] sm:$0xff]
                %366 = vst [vmem:[%s144 + $0x370] sm:$0xff] %v365
                %v367 = vld [vmem:[%s143 + $0xad8] sm:$0xff]
                %368 = vst [vmem:[%s144 + $0x378] sm:$0xff] %v367
                %v369 = vld [vmem:[%s143 + $0xb00] sm:$0xff]
                %370 = vst [vmem:[%s144 + $0x380] sm:$0xff] %v369
                %v371 = vld [vmem:[%s143 + $0xb08] sm:$0xff]
                %372 = vst [vmem:[%s144 + $0x388] sm:$0xff] %v371
                %v373 = vld [vmem:[%s143 + $0xb10] sm:$0xff]
                %374 = vst [vmem:[%s144 + $0x390] sm:$0xff] %v373
                %v375 = vld [vmem:[%s143 + $0xb18] sm:$0xff]
                %376 = vst [vmem:[%s144 + $0x398] sm:$0xff] %v375
                %v377 = vld [vmem:[%s143 + $0xb40] sm:$0xff]
                %378 = vst [vmem:[%s144 + $0x3a0] sm:$0xff] %v377
                %v379 = vld [vmem:[%s143 + $0xb48] sm:$0xff]
                %380 = vst [vmem:[%s144 + $0x3a8] sm:$0xff] %v379
                %v381 = vld [vmem:[%s143 + $0xb50] sm:$0xff]
                %382 = vst [vmem:[%s144 + $0x3b0] sm:$0xff] %v381
                %v383 = vld [vmem:[%s143 + $0xb58] sm:$0xff]
                %384 = vst [vmem:[%s144 + $0x3b8] sm:$0xff] %v383
                %v385 = vld [vmem:[%s143 + $0xb80] sm:$0xff]
                %386 = vst [vmem:[%s144 + $0x3c0] sm:$0xff] %v385
                %v387 = vld [vmem:[%s143 + $0xb88] sm:$0xff]
                %388 = vst [vmem:[%s144 + $0x3c8] sm:$0xff] %v387
                %v389 = vld [vmem:[%s143 + $0xb90] sm:$0xff]
                %390 = vst [vmem:[%s144 + $0x3d0] sm:$0xff] %v389
                %v391 = vld [vmem:[%s143 + $0xb98] sm:$0xff]
                %392 = vst [vmem:[%s144 + $0x3d8] sm:$0xff] %v391
                %v393 = vld [vmem:[%s143 + $0xbc0] sm:$0xff]
                %394 = vst [vmem:[%s144 + $0x3e0] sm:$0xff] %v393
                %v395 = vld [vmem:[%s143 + $0xbc8] sm:$0xff]
                %396 = vst [vmem:[%s144 + $0x3e8] sm:$0xff] %v395
                %v397 = vld [vmem:[%s143 + $0xbd0] sm:$0xff]
                %398 = vst [vmem:[%s144 + $0x3f0] sm:$0xff] %v397
                %v399 = vld [vmem:[%s143 + $0xbd8] sm:$0xff]
                %400 = vst [vmem:[%s144 + $0x3f8] sm:$0xff] %v399
              $region33: #{channel_attention.2} parent=27 // loop_footer
                %s142 = sadd.s32 1, %s138
              $region34: #{channel_attention.2} parent=27 // loop_footer_branch
                %137 = sbr.rel target = $region30
              $region35: #{channel_attention.2} parent=27 // loop_exit
                _
            $region28: #{channel_attention.2} parent=23 // pred_fallthru
              _
            // Predicated region
            $region36: #{channel_attention.2} parent=23 // pred_check
              _
            $region37: #{channel_attention.2} parent=23 // pred_check_branch
              %402 = sbr.rel target = $region39
            $region38: #{channel_attention.2} parent=23 // pred_region
              _
            $region39: #{channel_attention.2} parent=23 // pred_fallthru
              _
          $region24: #{channel_attention.2} parent=19 // pred_fallthru
            _
          %403 = vnop
        $region20: #{channel_attention.2} parent=15 // pred_fallthru
          _
      $region16: #{channel_attention.2} parent=5 // pred_fallthru
        _
      %p404 = scmp.le.s32.totalorder 1, %s9
      %p405 = scmp.lt.s32.totalorder %s9, 5
      %p406 = pnand %p404, %p405
      %p407 = pneg %p406
      // Predicated region
      $region40: #{channel_attention.2} parent=5 // pred_check
        _
      $region41: #{channel_attention.2} parent=5 // pred_check_branch
        %409 = sbr.rel (%p406) target = $region43
      $region42: #{channel_attention.2} parent=5 // pred_region
        %s410 = ssub.s32 %s9, 1
        %s411 = sand.u32 %s36, 1
        %s412 = sand.u32 %s36, 1
        %s413 = smul.addr %s412, 1024
        %s414 = scalar_lea.vmem [#allocation4], %s413
        // Predicated region
        $region44: #{channel_attention.2} parent=42 // pred_check
          %p415 = pneg %p49
        $region45: #{channel_attention.2} parent=42 // pred_check_branch
          %417 = sbr.rel (%p415) target = $region47
        $region46: #{channel_attention.2} parent=42 // pred_region
          _
        $region47: #{channel_attention.2} parent=42 // pred_fallthru
          _
        %s418 = sand.u32 %s36, 1
        %s419 = sand.u32 %s36, 1
        %s420 = smul.addr %s419, 1024
        %s421 = scalar_lea.vmem [#allocation4], %s420
        %p422 = pneg %p49
        %p423 = pneg %p46
        %p424 = pneg %p75
        %p425 = pneg %p72
        %p426 = scmp.lt.s32.totalorder %s18, 1
        %s427 = scalar_select %p426, %s18, 1
        %s428 = smul.addr %s427, 2
        %s429 = scalar_lea.vmem %s1, %s428
        %p430 = pneg %p101
        %p431 = pneg %p98
        %p432 = scmp.lt.s32.totalorder %s18, 1
        %s433 = scalar_select %p432, %s18, 1
        %s434 = smul.addr %s433, 2
        %s435 = scalar_lea.vmem %s2, %s434
        %s436 = smul.u32 16, %s18
        %s437 = smul.u32 4, %s19
        %p438 = scmp.lt.s32.totalorder %s18, 1
        %s439 = scalar_select %p438, %s18, 1
        %s440 = smul.addr %s439, 2
        %s441 = scalar_lea.vmem %s1, %s440
        %p442 = scmp.lt.s32.totalorder %s18, 1
        %s443 = scalar_select %p442, %s18, 1
        %s444 = smul.addr %s443, 2
        %s445 = scalar_lea.vmem %s2, %s444
        %p446 = scmp.eq.s32.totalorder %s19, 0
        // Predicated region
        $region48: #{channel_attention.2} parent=42 // pred_check
          %p447 = pneg %p446
        $region49: #{channel_attention.2} parent=42 // pred_check_branch
          %449 = sbr.rel (%p447) target = $region51
        $region50: #{channel_attention.2} parent=42 // pred_region
          %450 = vst [vmem:[#allocation2] sm:$0x3] 0.0
          %451 = vst [vmem:[#allocation3] sm:$0x3] -inf
        $region51: #{channel_attention.2} parent=42 // pred_fallthru
          _
        %v452 = vld [vmem:[%s414] sm:$0xff]
        %v453 = vld [vmem:[%s414 + $0x8] sm:$0xff]
        %v454 = vld [vmem:[%s414 + $0x10] sm:$0xff]
        %v455 = vld [vmem:[%s414 + $0x18] sm:$0xff]
        %v456 = vld [vmem:[%s414 + $0x20] sm:$0xff]
        %v457 = vld [vmem:[%s414 + $0x28] sm:$0xff]
        %v458 = vld [vmem:[%s414 + $0x30] sm:$0xff]
        %v459 = vld [vmem:[%s414 + $0x38] sm:$0xff]
        %v460 = vld [vmem:[%s414 + $0x40] sm:$0xff]
        %v461 = vld [vmem:[%s414 + $0x48] sm:$0xff]
        %v462 = vld [vmem:[%s414 + $0x50] sm:$0xff]
        %v463 = vld [vmem:[%s414 + $0x58] sm:$0xff]
        %v464 = vld [vmem:[%s414 + $0x60] sm:$0xff]
        %v465 = vld [vmem:[%s414 + $0x68] sm:$0xff]
        %v466 = vld [vmem:[%s414 + $0x70] sm:$0xff]
        %v467 = vld [vmem:[%s414 + $0x78] sm:$0xff]
        %v468 = vld [vmem:[%s414 + $0x80] sm:$0xff]
        %v469 = vld [vmem:[%s414 + $0x88] sm:$0xff]
        %v470 = vld [vmem:[%s414 + $0x90] sm:$0xff]
        %v471 = vld [vmem:[%s414 + $0x98] sm:$0xff]
        %v472 = vld [vmem:[%s414 + $0xa0] sm:$0xff]
        %v473 = vld [vmem:[%s414 + $0xa8] sm:$0xff]
        %v474 = vld [vmem:[%s414 + $0xb0] sm:$0xff]
        %v475 = vld [vmem:[%s414 + $0xb8] sm:$0xff]
        %v476 = vld [vmem:[%s414 + $0xc0] sm:$0xff]
        %v477 = vld [vmem:[%s414 + $0xc8] sm:$0xff]
        %v478 = vld [vmem:[%s414 + $0xd0] sm:$0xff]
        %v479 = vld [vmem:[%s414 + $0xd8] sm:$0xff]
        %v480 = vld [vmem:[%s414 + $0xe0] sm:$0xff]
        %v481 = vld [vmem:[%s414 + $0xe8] sm:$0xff]
        %v482 = vld [vmem:[%s414 + $0xf0] sm:$0xff]
        %v483 = vld [vmem:[%s414 + $0xf8] sm:$0xff]
        %v484 = vld [vmem:[%s414 + $0x100] sm:$0xff]
        %v485 = vld [vmem:[%s414 + $0x108] sm:$0xff]
        %v486 = vld [vmem:[%s414 + $0x110] sm:$0xff]
        %v487 = vld [vmem:[%s414 + $0x118] sm:$0xff]
        %v488 = vld [vmem:[%s414 + $0x120] sm:$0xff]
        %v489 = vld [vmem:[%s414 + $0x128] sm:$0xff]
        %v490 = vld [vmem:[%s414 + $0x130] sm:$0xff]
        %v491 = vld [vmem:[%s414 + $0x138] sm:$0xff]
        %v492 = vld [vmem:[%s414 + $0x140] sm:$0xff]
        %v493 = vld [vmem:[%s414 + $0x148] sm:$0xff]
        %v494 = vld [vmem:[%s414 + $0x150] sm:$0xff]
        %v495 = vld [vmem:[%s414 + $0x158] sm:$0xff]
        %v496 = vld [vmem:[%s414 + $0x160] sm:$0xff]
        %v497 = vld [vmem:[%s414 + $0x168] sm:$0xff]
        %v498 = vld [vmem:[%s414 + $0x170] sm:$0xff]
        %v499 = vld [vmem:[%s414 + $0x178] sm:$0xff]
        %v500 = vld [vmem:[%s414 + $0x180] sm:$0xff]
        %v501 = vld [vmem:[%s414 + $0x188] sm:$0xff]
        %v502 = vld [vmem:[%s414 + $0x190] sm:$0xff]
        %v503 = vld [vmem:[%s414 + $0x198] sm:$0xff]
        %v504 = vld [vmem:[%s414 + $0x1a0] sm:$0xff]
        %v505 = vld [vmem:[%s414 + $0x1a8] sm:$0xff]
        %v506 = vld [vmem:[%s414 + $0x1b0] sm:$0xff]
        %v507 = vld [vmem:[%s414 + $0x1b8] sm:$0xff]
        %v508 = vld [vmem:[%s414 + $0x1c0] sm:$0xff]
        %v509 = vld [vmem:[%s414 + $0x1c8] sm:$0xff]
        %v510 = vld [vmem:[%s414 + $0x1d0] sm:$0xff]
        %v511 = vld [vmem:[%s414 + $0x1d8] sm:$0xff]
        %v512 = vld [vmem:[%s414 + $0x1e0] sm:$0xff]
        %v513 = vld [vmem:[%s414 + $0x1e8] sm:$0xff]
        %v514 = vld [vmem:[%s414 + $0x1f0] sm:$0xff]
        %v515 = vld [vmem:[%s414 + $0x1f8] sm:$0xff]
        %v516 = vld [vmem:[%s414 + $0x200] sm:$0xff]
        %v517 = vld [vmem:[%s414 + $0x208] sm:$0xff]
        %v518 = vld [vmem:[%s414 + $0x210] sm:$0xff]
        %v519 = vld [vmem:[%s414 + $0x218] sm:$0xff]
        %v520 = vld [vmem:[%s414 + $0x220] sm:$0xff]
        %v521 = vld [vmem:[%s414 + $0x228] sm:$0xff]
        %v522 = vld [vmem:[%s414 + $0x230] sm:$0xff]
        %v523 = vld [vmem:[%s414 + $0x238] sm:$0xff]
        %v524 = vld [vmem:[%s414 + $0x240] sm:$0xff]
        %v525 = vld [vmem:[%s414 + $0x248] sm:$0xff]
        %v526 = vld [vmem:[%s414 + $0x250] sm:$0xff]
        %v527 = vld [vmem:[%s414 + $0x258] sm:$0xff]
        %v528 = vld [vmem:[%s414 + $0x260] sm:$0xff]
        %v529 = vld [vmem:[%s414 + $0x268] sm:$0xff]
        %v530 = vld [vmem:[%s414 + $0x270] sm:$0xff]
        %v531 = vld [vmem:[%s414 + $0x278] sm:$0xff]
        %v532 = vld [vmem:[%s414 + $0x280] sm:$0xff]
        %v533 = vld [vmem:[%s414 + $0x288] sm:$0xff]
        %v534 = vld [vmem:[%s414 + $0x290] sm:$0xff]
        %v535 = vld [vmem:[%s414 + $0x298] sm:$0xff]
        %v536 = vld [vmem:[%s414 + $0x2a0] sm:$0xff]
        %v537 = vld [vmem:[%s414 + $0x2a8] sm:$0xff]
        %v538 = vld [vmem:[%s414 + $0x2b0] sm:$0xff]
        %v539 = vld [vmem:[%s414 + $0x2b8] sm:$0xff]
        %v540 = vld [vmem:[%s414 + $0x2c0] sm:$0xff]
        %v541 = vld [vmem:[%s414 + $0x2c8] sm:$0xff]
        %v542 = vld [vmem:[%s414 + $0x2d0] sm:$0xff]
        %v543 = vld [vmem:[%s414 + $0x2d8] sm:$0xff]
        %v544 = vld [vmem:[%s414 + $0x2e0] sm:$0xff]
        %v545 = vld [vmem:[%s414 + $0x2e8] sm:$0xff]
        %v546 = vld [vmem:[%s414 + $0x2f0] sm:$0xff]
        %v547 = vld [vmem:[%s414 + $0x2f8] sm:$0xff]
        %v548 = vld [vmem:[%s414 + $0x300] sm:$0xff]
        %v549 = vld [vmem:[%s414 + $0x308] sm:$0xff]
        %v550 = vld [vmem:[%s414 + $0x310] sm:$0xff]
        %v551 = vld [vmem:[%s414 + $0x318] sm:$0xff]
        %v552 = vld [vmem:[%s414 + $0x320] sm:$0xff]
        %v553 = vld [vmem:[%s414 + $0x328] sm:$0xff]
        %v554 = vld [vmem:[%s414 + $0x330] sm:$0xff]
        %v555 = vld [vmem:[%s414 + $0x338] sm:$0xff]
        %v556 = vld [vmem:[%s414 + $0x340] sm:$0xff]
        %v557 = vld [vmem:[%s414 + $0x348] sm:$0xff]
        %v558 = vld [vmem:[%s414 + $0x350] sm:$0xff]
        %v559 = vld [vmem:[%s414 + $0x358] sm:$0xff]
        %v560 = vld [vmem:[%s414 + $0x360] sm:$0xff]
        %v561 = vld [vmem:[%s414 + $0x368] sm:$0xff]
        %v562 = vld [vmem:[%s414 + $0x370] sm:$0xff]
        %v563 = vld [vmem:[%s414 + $0x378] sm:$0xff]
        %v564 = vld [vmem:[%s414 + $0x380] sm:$0xff]
        %v565 = vld [vmem:[%s414 + $0x388] sm:$0xff]
        %v566 = vld [vmem:[%s414 + $0x390] sm:$0xff]
        %v567 = vld [vmem:[%s414 + $0x398] sm:$0xff]
        %v568 = vld [vmem:[%s414 + $0x3a0] sm:$0xff]
        %v569 = vld [vmem:[%s414 + $0x3a8] sm:$0xff]
        %v570 = vld [vmem:[%s414 + $0x3b0] sm:$0xff]
        %v571 = vld [vmem:[%s414 + $0x3b8] sm:$0xff]
        %v572 = vld [vmem:[%s414 + $0x3c0] sm:$0xff]
        %v573 = vld [vmem:[%s414 + $0x3c8] sm:$0xff]
        %v574 = vld [vmem:[%s414 + $0x3d0] sm:$0xff]
        %v575 = vld [vmem:[%s414 + $0x3d8] sm:$0xff]
        %v576 = vld [vmem:[%s414 + $0x3e0] sm:$0xff]
        %v577 = vld [vmem:[%s414 + $0x3e8] sm:$0xff]
        %v578 = vld [vmem:[%s414 + $0x3f0] sm:$0xff]
        %v579 = vld [vmem:[%s414 + $0x3f8] sm:$0xff]
        %v580 = vld [vmem:[#allocation2] sm:$0x3]
        %v581 = vadd.f32 %v452, %v453
        %v582 = vadd.f32 %v581, %v454
        %v583 = vadd.f32 %v582, %v455
        %584 = vadd.xlane.f32.xlu0 %v583
        %v585 = vpop.xlane.xlu0 %584
        %v586 = vadd.f32 %v456, %v457
        %v587 = vadd.f32 %v586, %v458
        %v588 = vadd.f32 %v587, %v459
        %589 = vadd.xlane.f32.xlu0 %v588
        %v590 = vpop.xlane.xlu0 %589
        %v591 = vadd.f32 %v460, %v461
        %v592 = vadd.f32 %v591, %v462
        %v593 = vadd.f32 %v592, %v463
        %594 = vadd.xlane.f32.xlu0 %v593
        %v595 = vpop.xlane.xlu0 %594
        %v596 = vadd.f32 %v464, %v465
        %v597 = vadd.f32 %v596, %v466
        %v598 = vadd.f32 %v597, %v467
        %599 = vadd.xlane.f32.xlu0 %v598
        %v600 = vpop.xlane.xlu0 %599
        %v601 = vadd.f32 %v468, %v469
        %v602 = vadd.f32 %v601, %v470
        %v603 = vadd.f32 %v602, %v471
        %604 = vadd.xlane.f32.xlu0 %v603
        %v605 = vpop.xlane.xlu0 %604
        %v606 = vadd.f32 %v472, %v473
        %v607 = vadd.f32 %v606, %v474
        %v608 = vadd.f32 %v607, %v475
        %609 = vadd.xlane.f32.xlu0 %v608
        %v610 = vpop.xlane.xlu0 %609
        %v611 = vadd.f32 %v476, %v477
        %v612 = vadd.f32 %v611, %v478
        %v613 = vadd.f32 %v612, %v479
        %614 = vadd.xlane.f32.xlu0 %v613
        %v615 = vpop.xlane.xlu0 %614
        %v616 = vadd.f32 %v480, %v481
        %v617 = vadd.f32 %v616, %v482
        %v618 = vadd.f32 %v617, %v483
        %619 = vadd.xlane.f32.xlu0 %v618
        %v620 = vpop.xlane.xlu0 %619
        %v621 = vadd.f32 %v484, %v485
        %v622 = vadd.f32 %v621, %v486
        %v623 = vadd.f32 %v622, %v487
        %624 = vadd.xlane.f32.xlu0 %v623
        %v625 = vpop.xlane.xlu0 %624
        %v626 = vadd.f32 %v488, %v489
        %v627 = vadd.f32 %v626, %v490
        %v628 = vadd.f32 %v627, %v491
        %629 = vadd.xlane.f32.xlu0 %v628
        %v630 = vpop.xlane.xlu0 %629
        %v631 = vadd.f32 %v492, %v493
        %v632 = vadd.f32 %v631, %v494
        %v633 = vadd.f32 %v632, %v495
        %634 = vadd.xlane.f32.xlu0 %v633
        %v635 = vpop.xlane.xlu0 %634
        %v636 = vadd.f32 %v496, %v497
        %v637 = vadd.f32 %v636, %v498
        %v638 = vadd.f32 %v637, %v499
        %639 = vadd.xlane.f32.xlu0 %v638
        %v640 = vpop.xlane.xlu0 %639
        %v641 = vadd.f32 %v500, %v501
        %v642 = vadd.f32 %v641, %v502
        %v643 = vadd.f32 %v642, %v503
        %644 = vadd.xlane.f32.xlu0 %v643
        %v645 = vpop.xlane.xlu0 %644
        %v646 = vadd.f32 %v504, %v505
        %v647 = vadd.f32 %v646, %v506
        %v648 = vadd.f32 %v647, %v507
        %649 = vadd.xlane.f32.xlu0 %v648
        %v650 = vpop.xlane.xlu0 %649
        %v651 = vadd.f32 %v508, %v509
        %v652 = vadd.f32 %v651, %v510
        %v653 = vadd.f32 %v652, %v511
        %654 = vadd.xlane.f32.xlu0 %v653
        %v655 = vpop.xlane.xlu0 %654
        %v656 = vadd.f32 %v512, %v513
        %v657 = vadd.f32 %v656, %v514
        %v658 = vadd.f32 %v657, %v515
        %659 = vadd.xlane.f32.xlu0 %v658
        %v660 = vpop.xlane.xlu0 %659
        %v661 = vadd.f32 %v516, %v517
        %v662 = vadd.f32 %v661, %v518
        %v663 = vadd.f32 %v662, %v519
        %664 = vadd.xlane.f32.xlu0 %v663
        %v665 = vpop.xlane.xlu0 %664
        %v666 = vadd.f32 %v520, %v521
        %v667 = vadd.f32 %v666, %v522
        %v668 = vadd.f32 %v667, %v523
        %669 = vadd.xlane.f32.xlu0 %v668
        %v670 = vpop.xlane.xlu0 %669
        %v671 = vadd.f32 %v524, %v525
        %v672 = vadd.f32 %v671, %v526
        %v673 = vadd.f32 %v672, %v527
        %674 = vadd.xlane.f32.xlu0 %v673
        %v675 = vpop.xlane.xlu0 %674
        %v676 = vadd.f32 %v528, %v529
        %v677 = vadd.f32 %v676, %v530
        %v678 = vadd.f32 %v677, %v531
        %679 = vadd.xlane.f32.xlu0 %v678
        %v680 = vpop.xlane.xlu0 %679
        %v681 = vadd.f32 %v532, %v533
        %v682 = vadd.f32 %v681, %v534
        %v683 = vadd.f32 %v682, %v535
        %684 = vadd.xlane.f32.xlu0 %v683
        %v685 = vpop.xlane.xlu0 %684
        %v686 = vadd.f32 %v536, %v537
        %v687 = vadd.f32 %v686, %v538
        %v688 = vadd.f32 %v687, %v539
        %689 = vadd.xlane.f32.xlu0 %v688
        %v690 = vpop.xlane.xlu0 %689
        %v691 = vadd.f32 %v540, %v541
        %v692 = vadd.f32 %v691, %v542
        %v693 = vadd.f32 %v692, %v543
        %694 = vadd.xlane.f32.xlu0 %v693
        %v695 = vpop.xlane.xlu0 %694
        %v696 = vadd.f32 %v544, %v545
        %v697 = vadd.f32 %v696, %v546
        %v698 = vadd.f32 %v697, %v547
        %699 = vadd.xlane.f32.xlu0 %v698
        %v700 = vpop.xlane.xlu0 %699
        %v701 = vadd.f32 %v548, %v549
        %v702 = vadd.f32 %v701, %v550
        %v703 = vadd.f32 %v702, %v551
        %704 = vadd.xlane.f32.xlu0 %v703
        %v705 = vpop.xlane.xlu0 %704
        %v706 = vadd.f32 %v552, %v553
        %v707 = vadd.f32 %v706, %v554
        %v708 = vadd.f32 %v707, %v555
        %709 = vadd.xlane.f32.xlu0 %v708
        %v710 = vpop.xlane.xlu0 %709
        %v711 = vadd.f32 %v556, %v557
        %v712 = vadd.f32 %v711, %v558
        %v713 = vadd.f32 %v712, %v559
        %714 = vadd.xlane.f32.xlu0 %v713
        %v715 = vpop.xlane.xlu0 %714
        %v716 = vadd.f32 %v560, %v561
        %v717 = vadd.f32 %v716, %v562
        %v718 = vadd.f32 %v717, %v563
        %719 = vadd.xlane.f32.xlu0 %v718
        %v720 = vpop.xlane.xlu0 %719
        %v721 = vadd.f32 %v564, %v565
        %v722 = vadd.f32 %v721, %v566
        %v723 = vadd.f32 %v722, %v567
        %724 = vadd.xlane.f32.xlu0 %v723
        %v725 = vpop.xlane.xlu0 %724
        %v726 = vadd.f32 %v568, %v569
        %v727 = vadd.f32 %v726, %v570
        %v728 = vadd.f32 %v727, %v571
        %729 = vadd.xlane.f32.xlu0 %v728
        %v730 = vpop.xlane.xlu0 %729
        %v731 = vadd.f32 %v572, %v573
        %v732 = vadd.f32 %v731, %v574
        %v733 = vadd.f32 %v732, %v575
        %734 = vadd.xlane.f32.xlu0 %v733
        %v735 = vpop.xlane.xlu0 %734
        %v736 = vadd.f32 %v576, %v577
        %v737 = vadd.f32 %v736, %v578
        %v738 = vadd.f32 %v737, %v579
        %739 = vadd.xlane.f32.xlu0 %v738
        %v740 = vpop.xlane.xlu0 %739
        %v773 = vlaneseq
        %v774 = vand.u32 %v773, 127
        %v775 = vperm.slane %v585, %v774
        %v776 = vadd.s32 %v774, 4294967288
        %v777 = vperm.slane %v590, %v776
        %vm778 = vcmask 130112
        %v779 = vsel %vm778, %v777, %v775
        %v780 = vadd.s32 %v774, 4294967280
        %v781 = vperm.slane %v595, %v780
        %vm782 = vcmask 195712
        %v783 = vsel %vm782, %v781, %v779
        %v784 = vadd.s32 %v774, 4294967272
        %v785 = vperm.slane %v600, %v784
        %vm786 = vcmask 261312
        %v787 = vsel %vm786, %v785, %v783
        %v788 = vadd.s32 %v774, 4294967264
        %v789 = vperm.slane %v605, %v788
        %vm790 = vcmask 326912
        %v791 = vsel %vm790, %v789, %v787
        %v792 = vadd.s32 %v774, 4294967256
        %v793 = vperm.slane %v610, %v792
        %vm794 = vcmask 392512
        %v795 = vsel %vm794, %v793, %v791
        %v796 = vadd.s32 %v774, 4294967248
        %v797 = vperm.slane %v615, %v796
        %vm798 = vcmask 458112
        %v799 = vsel %vm798, %v797, %v795
        %v800 = vadd.s32 %v774, 4294967240
        %v801 = vperm.slane %v620, %v800
        %vm802 = vcmask 523712
        %v803 = vsel %vm802, %v801, %v799
        %v804 = vadd.s32 %v774, 4294967232
        %v805 = vperm.slane %v625, %v804
        %vm806 = vcmask 589312
        %v807 = vsel %vm806, %v805, %v803
        %v808 = vadd.s32 %v774, 4294967224
        %v809 = vperm.slane %v630, %v808
        %vm810 = vcmask 654912
        %v811 = vsel %vm810, %v809, %v807
        %v812 = vadd.s32 %v774, 4294967216
        %v813 = vperm.slane %v635, %v812
        %vm814 = vcmask 720512
        %v815 = vsel %vm814, %v813, %v811
        %v816 = vadd.s32 %v774, 4294967208
        %v817 = vperm.slane %v640, %v816
        %vm818 = vcmask 786112
        %v819 = vsel %vm818, %v817, %v815
        %v820 = vadd.s32 %v774, 4294967200
        %v821 = vperm.slane %v645, %v820
        %vm822 = vcmask 851712
        %v823 = vsel %vm822, %v821, %v819
        %v824 = vadd.s32 %v774, 4294967192
        %v825 = vperm.slane %v650, %v824
        %vm826 = vcmask 917312
        %v827 = vsel %vm826, %v825, %v823
        %v828 = vadd.s32 %v774, 4294967184
        %v829 = vperm.slane %v655, %v828
        %vm830 = vcmask 982912
        %v831 = vsel %vm830, %v829, %v827
        %v832 = vadd.s32 %v774, 4294967176
        %v833 = vperm.slane %v660, %v832
        %vm834 = vcmask 1048512
        %v835 = vsel %vm834, %v833, %v831
        %v836 = vperm.slane %v665, %v774
        %v837 = vperm.slane %v670, %v776
        %v838 = vsel %vm778, %v837, %v836
        %v839 = vperm.slane %v675, %v780
        %v840 = vsel %vm782, %v839, %v838
        %v841 = vperm.slane %v680, %v784
        %v842 = vsel %vm786, %v841, %v840
        %v843 = vperm.slane %v685, %v788
        %v844 = vsel %vm790, %v843, %v842
        %v845 = vperm.slane %v690, %v792
        %v846 = vsel %vm794, %v845, %v844
        %v847 = vperm.slane %v695, %v796
        %v848 = vsel %vm798, %v847, %v846
        %v849 = vperm.slane %v700, %v800
        %v850 = vsel %vm802, %v849, %v848
        %v851 = vperm.slane %v705, %v804
        %v852 = vsel %vm806, %v851, %v850
        %v853 = vperm.slane %v710, %v808
        %v854 = vsel %vm810, %v853, %v852
        %v855 = vperm.slane %v715, %v812
        %v856 = vsel %vm814, %v855, %v854
        %v857 = vperm.slane %v720, %v816
        %v858 = vsel %vm818, %v857, %v856
        %v859 = vperm.slane %v725, %v820
        %v860 = vsel %vm822, %v859, %v858
        %v861 = vperm.slane %v730, %v824
        %v862 = vsel %vm826, %v861, %v860
        %v863 = vperm.slane %v735, %v828
        %v864 = vsel %vm830, %v863, %v862
        %v865 = vperm.slane %v740, %v832
        %v866 = vsel %vm834, %v865, %v864
        %vm867 = vcmask 1041409
        %v868 = vsel %vm867, %v866, %v835
        %v870 = vadd.f32 %v580, %v868
        %871 = vst [vmem:[#allocation2] sm:$0x3] %v870
        %v872 = vld [vmem:[#allocation3] sm:$0x3]
        %v873 = vmax.f32 %v452, %v453
        %v874 = vmax.f32 %v873, %v454
        %v875 = vmax.f32 %v874, %v455
        %876 = vmax.xlane.f32.xlu0 %v875
        %v877 = vpop.xlane.xlu0 %876
        %v878 = vmax.f32 %v456, %v457
        %v879 = vmax.f32 %v878, %v458
        %v880 = vmax.f32 %v879, %v459
        %881 = vmax.xlane.f32.xlu0 %v880
        %v882 = vpop.xlane.xlu0 %881
        %v883 = vmax.f32 %v460, %v461
        %v884 = vmax.f32 %v883, %v462
        %v885 = vmax.f32 %v884, %v463
        %886 = vmax.xlane.f32.xlu0 %v885
        %v887 = vpop.xlane.xlu0 %886
        %v888 = vmax.f32 %v464, %v465
        %v889 = vmax.f32 %v888, %v466
        %v890 = vmax.f32 %v889, %v467
        %891 = vmax.xlane.f32.xlu0 %v890
        %v892 = vpop.xlane.xlu0 %891
        %v893 = vmax.f32 %v468, %v469
        %v894 = vmax.f32 %v893, %v470
        %v895 = vmax.f32 %v894, %v471
        %896 = vmax.xlane.f32.xlu0 %v895
        %v897 = vpop.xlane.xlu0 %896
        %v898 = vmax.f32 %v472, %v473
        %v899 = vmax.f32 %v898, %v474
        %v900 = vmax.f32 %v899, %v475
        %901 = vmax.xlane.f32.xlu0 %v900
        %v902 = vpop.xlane.xlu0 %901
        %v903 = vmax.f32 %v476, %v477
        %v904 = vmax.f32 %v903, %v478
        %v905 = vmax.f32 %v904, %v479
        %906 = vmax.xlane.f32.xlu0 %v905
        %v907 = vpop.xlane.xlu0 %906
        %v908 = vmax.f32 %v480, %v481
        %v909 = vmax.f32 %v908, %v482
        %v910 = vmax.f32 %v909, %v483
        %911 = vmax.xlane.f32.xlu0 %v910
        %v912 = vpop.xlane.xlu0 %911
        %v913 = vmax.f32 %v484, %v485
        %v914 = vmax.f32 %v913, %v486
        %v915 = vmax.f32 %v914, %v487
        %916 = vmax.xlane.f32.xlu0 %v915
        %v917 = vpop.xlane.xlu0 %916
        %v918 = vmax.f32 %v488, %v489
        %v919 = vmax.f32 %v918, %v490
        %v920 = vmax.f32 %v919, %v491
        %921 = vmax.xlane.f32.xlu0 %v920
        %v922 = vpop.xlane.xlu0 %921
        %v923 = vmax.f32 %v492, %v493
        %v924 = vmax.f32 %v923, %v494
        %v925 = vmax.f32 %v924, %v495
        %926 = vmax.xlane.f32.xlu0 %v925
        %v927 = vpop.xlane.xlu0 %926
        %v928 = vmax.f32 %v496, %v497
        %v929 = vmax.f32 %v928, %v498
        %v930 = vmax.f32 %v929, %v499
        %931 = vmax.xlane.f32.xlu0 %v930
        %v932 = vpop.xlane.xlu0 %931
        %v933 = vmax.f32 %v500, %v501
        %v934 = vmax.f32 %v933, %v502
        %v935 = vmax.f32 %v934, %v503
        %936 = vmax.xlane.f32.xlu0 %v935
        %v937 = vpop.xlane.xlu0 %936
        %v938 = vmax.f32 %v504, %v505
        %v939 = vmax.f32 %v938, %v506
        %v940 = vmax.f32 %v939, %v507
        %941 = vmax.xlane.f32.xlu0 %v940
        %v942 = vpop.xlane.xlu0 %941
        %v943 = vmax.f32 %v508, %v509
        %v944 = vmax.f32 %v943, %v510
        %v945 = vmax.f32 %v944, %v511
        %946 = vmax.xlane.f32.xlu0 %v945
        %v947 = vpop.xlane.xlu0 %946
        %v948 = vmax.f32 %v512, %v513
        %v949 = vmax.f32 %v948, %v514
        %v950 = vmax.f32 %v949, %v515
        %951 = vmax.xlane.f32.xlu0 %v950
        %v952 = vpop.xlane.xlu0 %951
        %v953 = vmax.f32 %v516, %v517
        %v954 = vmax.f32 %v953, %v518
        %v955 = vmax.f32 %v954, %v519
        %956 = vmax.xlane.f32.xlu0 %v955
        %v957 = vpop.xlane.xlu0 %956
        %v958 = vmax.f32 %v520, %v521
        %v959 = vmax.f32 %v958, %v522
        %v960 = vmax.f32 %v959, %v523
        %961 = vmax.xlane.f32.xlu0 %v960
        %v962 = vpop.xlane.xlu0 %961
        %v963 = vmax.f32 %v524, %v525
        %v964 = vmax.f32 %v963, %v526
        %v965 = vmax.f32 %v964, %v527
        %966 = vmax.xlane.f32.xlu0 %v965
        %v967 = vpop.xlane.xlu0 %966
        %v968 = vmax.f32 %v528, %v529
        %v969 = vmax.f32 %v968, %v530
        %v970 = vmax.f32 %v969, %v531
        %971 = vmax.xlane.f32.xlu0 %v970
        %v972 = vpop.xlane.xlu0 %971
        %v973 = vmax.f32 %v532, %v533
        %v974 = vmax.f32 %v973, %v534
        %v975 = vmax.f32 %v974, %v535
        %976 = vmax.xlane.f32.xlu0 %v975
        %v977 = vpop.xlane.xlu0 %976
        %v978 = vmax.f32 %v536, %v537
        %v979 = vmax.f32 %v978, %v538
        %v980 = vmax.f32 %v979, %v539
        %981 = vmax.xlane.f32.xlu0 %v980
        %v982 = vpop.xlane.xlu0 %981
        %v983 = vmax.f32 %v540, %v541
        %v984 = vmax.f32 %v983, %v542
        %v985 = vmax.f32 %v984, %v543
        %986 = vmax.xlane.f32.xlu0 %v985
        %v987 = vpop.xlane.xlu0 %986
        %v988 = vmax.f32 %v544, %v545
        %v989 = vmax.f32 %v988, %v546
        %v990 = vmax.f32 %v989, %v547
        %991 = vmax.xlane.f32.xlu0 %v990
        %v992 = vpop.xlane.xlu0 %991
        %v993 = vmax.f32 %v548, %v549
        %v994 = vmax.f32 %v993, %v550
        %v995 = vmax.f32 %v994, %v551
        %996 = vmax.xlane.f32.xlu0 %v995
        %v997 = vpop.xlane.xlu0 %996
        %v998 = vmax.f32 %v552, %v553
        %v999 = vmax.f32 %v998, %v554
        %v1000 = vmax.f32 %v999, %v555
        %1001 = vmax.xlane.f32.xlu0 %v1000
        %v1002 = vpop.xlane.xlu0 %1001
        %v1003 = vmax.f32 %v556, %v557
        %v1004 = vmax.f32 %v1003, %v558
        %v1005 = vmax.f32 %v1004, %v559
        %1006 = vmax.xlane.f32.xlu0 %v1005
        %v1007 = vpop.xlane.xlu0 %1006
        %v1008 = vmax.f32 %v560, %v561
        %v1009 = vmax.f32 %v1008, %v562
        %v1010 = vmax.f32 %v1009, %v563
        %1011 = vmax.xlane.f32.xlu0 %v1010
        %v1012 = vpop.xlane.xlu0 %1011
        %v1013 = vmax.f32 %v564, %v565
        %v1014 = vmax.f32 %v1013, %v566
        %v1015 = vmax.f32 %v1014, %v567
        %1016 = vmax.xlane.f32.xlu0 %v1015
        %v1017 = vpop.xlane.xlu0 %1016
        %v1018 = vmax.f32 %v568, %v569
        %v1019 = vmax.f32 %v1018, %v570
        %v1020 = vmax.f32 %v1019, %v571
        %1021 = vmax.xlane.f32.xlu0 %v1020
        %v1022 = vpop.xlane.xlu0 %1021
        %v1023 = vmax.f32 %v572, %v573
        %v1024 = vmax.f32 %v1023, %v574
        %v1025 = vmax.f32 %v1024, %v575
        %1026 = vmax.xlane.f32.xlu0 %v1025
        %v1027 = vpop.xlane.xlu0 %1026
        %v1028 = vmax.f32 %v576, %v577
        %v1029 = vmax.f32 %v1028, %v578
        %v1030 = vmax.f32 %v1029, %v579
        %1031 = vmax.xlane.f32.xlu0 %v1030
        %v1032 = vpop.xlane.xlu0 %1031
        %v1065 = vperm.slane %v877, %v774
        %v1066 = vperm.slane %v882, %v776
        %v1067 = vsel %vm778, %v1066, %v1065
        %v1068 = vperm.slane %v887, %v780
        %v1069 = vsel %vm782, %v1068, %v1067
        %v1070 = vperm.slane %v892, %v784
        %v1071 = vsel %vm786, %v1070, %v1069
        %v1072 = vperm.slane %v897, %v788
        %v1073 = vsel %vm790, %v1072, %v1071
        %v1074 = vperm.slane %v902, %v792
        %v1075 = vsel %vm794, %v1074, %v1073
        %v1076 = vperm.slane %v907, %v796
        %v1077 = vsel %vm798, %v1076, %v1075
        %v1078 = vperm.slane %v912, %v800
        %v1079 = vsel %vm802, %v1078, %v1077
        %v1080 = vperm.slane %v917, %v804
        %v1081 = vsel %vm806, %v1080, %v1079
        %v1082 = vperm.slane %v922, %v808
        %v1083 = vsel %vm810, %v1082, %v1081
        %v1084 = vperm.slane %v927, %v812
        %v1085 = vsel %vm814, %v1084, %v1083
        %v1086 = vperm.slane %v932, %v816
        %v1087 = vsel %vm818, %v1086, %v1085
        %v1088 = vperm.slane %v937, %v820
        %v1089 = vsel %vm822, %v1088, %v1087
        %v1090 = vperm.slane %v942, %v824
        %v1091 = vsel %vm826, %v1090, %v1089
        %v1092 = vperm.slane %v947, %v828
        %v1093 = vsel %vm830, %v1092, %v1091
        %v1094 = vperm.slane %v952, %v832
        %v1095 = vsel %vm834, %v1094, %v1093
        %v1096 = vperm.slane %v957, %v774
        %v1097 = vperm.slane %v962, %v776
        %v1098 = vsel %vm778, %v1097, %v1096
        %v1099 = vperm.slane %v967, %v780
        %v1100 = vsel %vm782, %v1099, %v1098
        %v1101 = vperm.slane %v972, %v784
        %v1102 = vsel %vm786, %v1101, %v1100
        %v1103 = vperm.slane %v977, %v788
        %v1104 = vsel %vm790, %v1103, %v1102
        %v1105 = vperm.slane %v982, %v792
        %v1106 = vsel %vm794, %v1105, %v1104
        %v1107 = vperm.slane %v987, %v796
        %v1108 = vsel %vm798, %v1107, %v1106
        %v1109 = vperm.slane %v992, %v800
        %v1110 = vsel %vm802, %v1109, %v1108
        %v1111 = vperm.slane %v997, %v804
        %v1112 = vsel %vm806, %v1111, %v1110
        %v1113 = vperm.slane %v1002, %v808
        %v1114 = vsel %vm810, %v1113, %v1112
        %v1115 = vperm.slane %v1007, %v812
        %v1116 = vsel %vm814, %v1115, %v1114
        %v1117 = vperm.slane %v1012, %v816
        %v1118 = vsel %vm818, %v1117, %v1116
        %v1119 = vperm.slane %v1017, %v820
        %v1120 = vsel %vm822, %v1119, %v1118
        %v1121 = vperm.slane %v1022, %v824
        %v1122 = vsel %vm826, %v1121, %v1120
        %v1123 = vperm.slane %v1027, %v828
        %v1124 = vsel %vm830, %v1123, %v1122
        %v1125 = vperm.slane %v1032, %v832
        %v1126 = vsel %vm834, %v1125, %v1124
        %v1127 = vsel %vm867, %v1126, %v1095
        %v1129 = vmax.f32 %v872, %v1127
        %1130 = vst [vmem:[#allocation3] sm:$0x3] %v1129
        %p1131 = scmp.eq.s32.totalorder %s19, 1
        // Predicated region
        $region52: #{channel_attention.2} parent=42 // pred_check
          %p1132 = pneg %p1131
        $region53: #{channel_attention.2} parent=42 // pred_check_branch
          %1134 = sbr.rel (%p1132) target = $region55
        $region54: #{channel_attention.2} parent=42 // pred_region
          %v1135 = vld [vmem:[#allocation2] sm:$0x3]
          %v1136 = vmul.f32 %v1135, 0.0009765625
          %1137 = vst [vmem:[%s441] sm:$0x3] %v1136
          %v1138 = vld [vmem:[#allocation3] sm:$0x3]
          %1139 = vst [vmem:[%s445] sm:$0x3] %v1138
        $region55: #{channel_attention.2} parent=42 // pred_fallthru
          _
        %p1140 = scmp.lt.s32.totalorder %s18, 1
        %s1141 = scalar_select %p1140, %s18, 1
        %s1142 = smul.addr %s1141, 2
        %s1143 = scalar_lea.vmem %s1, %s1142
        %p1144 = scmp.lt.s32.totalorder %s18, 1
        %s1145 = scalar_select %p1144, %s18, 1
        %s1146 = smul.addr %s1145, 2
        %s1147 = scalar_lea.vmem %s2, %s1146
        // Predicated region
        $region56: #{channel_attention.2} parent=42 // pred_check
          %p1148 = pneg %p72
        $region57: #{channel_attention.2} parent=42 // pred_check_branch
          %1150 = sbr.rel (%p1148) target = $region59
        $region58: #{channel_attention.2} parent=42 // pred_region
          _
        $region59: #{channel_attention.2} parent=42 // pred_fallthru
          _
        // Predicated region
        $region60: #{channel_attention.2} parent=42 // pred_check
          %p1151 = pneg %p98
        $region61: #{channel_attention.2} parent=42 // pred_check_branch
          %1153 = sbr.rel (%p1151) target = $region63
        $region62: #{channel_attention.2} parent=42 // pred_region
          _
        $region63: #{channel_attention.2} parent=42 // pred_fallthru
          _
      $region43: #{channel_attention.2} parent=5 // pred_fallthru
        _
      %p1154 = scmp.le.s32.totalorder 2, %s9
      // Predicated region
      $region64: #{channel_attention.2} parent=5 // pred_check
        %p1155 = pneg %p1154
      $region65: #{channel_attention.2} parent=5 // pred_check_branch
        %1157 = sbr.rel (%p1155) target = $region67
      $region66: #{channel_attention.2} parent=5 // pred_region
        %s1158 = ssub.s32 %s9, 2
        // Predicated region
        $region68: #{channel_attention.2} parent=66 // pred_check
          %p1159 = pneg %p78
        $region69: #{channel_attention.2} parent=66 // pred_check_branch
          %1161 = sbr.rel (%p1159) target = $region71
        $region70: #{channel_attention.2} parent=66 // pred_region
          %p1162 = scmp.lt.s32.totalorder %s20, 1
          %s1163 = scalar_select %p1162, %s20, 1
          %s1164 = smul.addr %s1163, 2
          %s1165 = scalar_lea.vmem %s1, %s1164
        $region71: #{channel_attention.2} parent=66 // pred_fallthru
          _
        // Predicated region
        $region72: #{channel_attention.2} parent=66 // pred_check
          %p1166 = pneg %p104
        $region73: #{channel_attention.2} parent=66 // pred_check_branch
          %1168 = sbr.rel (%p1166) target = $region75
        $region74: #{channel_attention.2} parent=66 // pred_region
          %p1169 = scmp.lt.s32.totalorder %s20, 1
          %s1170 = scalar_select %p1169, %s20, 1
          %s1171 = smul.addr %s1170, 2
          %s1172 = scalar_lea.vmem %s2, %s1171
        $region75: #{channel_attention.2} parent=66 // pred_fallthru
          _
      $region67: #{channel_attention.2} parent=5 // pred_fallthru
        _
    $region6: #{channel_attention.2} parent=1 // loop_footer
      %s13 = sadd.s32 1, %s9
    $region7: #{channel_attention.2} parent=1 // loop_footer_branch
      %8 = sbr.rel target = $region3
    $region8: #{channel_attention.2} parent=1 // loop_exit
      _

</llo_original>
